<compile_context>
chip_gen: v5e
topology: v5e:2x2
jax: 0.10.0
libtpu: 0.0.40
codegen_flags: <defaults>
</compile_context>

<pallas_src>
import functools
import math

import jax
import jax.numpy as jnp
from jax.experimental import pallas as pl
from jax.experimental.pallas import tpu as pltpu

_LANE = 128
_SUBLANE = 8


def _round_up(x, m):
    return ((x + m - 1) // m) * m


def _cdiv(a, b):
    return (a + b - 1) // b


def _sigmoid_eup(h):
    # sigmoid(h) = 1 / (1 + exp(-h)); exp and the approx reciprocal both go to the EUP.
    return pl.reciprocal(1.0 + jnp.exp(-h), approx=True)


def _triplet_kernel(xq_ref, xp_ref, xn_ref,
                    qw1_ref, qb1_ref, qw2_ref, qb2_ref, qw3_ref, qb3_ref,
                    dw1_ref, db1_ref, dw2_ref, db2_ref, dw3_ref, db3_ref,
                    oq_ref, op_ref, on_ref):
    """Fused triplet forward: three 3-layer MLP chains in one kernel body.

    Each chain: sigmoid(xW1+b1) -> sigmoid(.W2+b2) -> .W3+b3.  bf16 MXU operands,
    f32 accumulation / bias / activation math, bf16 output store.
    Dropout(p=0.9) is the identity in eval/inference mode.
    """
    # TODO(synk): training-mode dropout (stochastic masking via pltpu.prng_*) not
    # implemented; eval semantics are used.

    def mlp3(x_ref, w1, b1, w2, b2, w3, b3, o_ref):
        h = jnp.dot(x_ref[...].astype(jnp.bfloat16), w1[...],
                    preferred_element_type=jnp.float32) + b1[...]
        h = _sigmoid_eup(h)
        h = jnp.dot(h.astype(jnp.bfloat16), w2[...],
                    preferred_element_type=jnp.float32) + b2[...]
        h = _sigmoid_eup(h)
        out = jnp.dot(h.astype(jnp.bfloat16), w3[...],
                      preferred_element_type=jnp.float32) + b3[...]
        o_ref[...] = out.astype(o_ref.dtype)

    mlp3(xq_ref, qw1_ref, qb1_ref, qw2_ref, qb2_ref, qw3_ref, qb3_ref, oq_ref)
    # Positive and negative documents share the document weights (read once per step).
    mlp3(xp_ref, dw1_ref, db1_ref, dw2_ref, db2_ref, dw3_ref, db3_ref, op_ref)
    mlp3(xn_ref, dw1_ref, db1_ref, dw2_ref, db2_ref, dw3_ref, db3_ref, on_ref)


def _choose_tiling(batch, tile_b):
    """Padding-aware batch tiling; >=2 tiles when feasible so v7x's 2nd TC gets work."""
    n_tiles = max(1, _cdiv(batch, tile_b))
    if n_tiles == 1 and batch >= 2 * _SUBLANE:
        n_tiles = 2  # harmless extra grid step on v5e/v6e, up to 2x on v7x
    tb = _round_up(_cdiv(batch, n_tiles), _SUBLANE)
    return tb, tb * n_tiles


@functools.partial(jax.jit,
                   static_argnames=("n_query_output", "n_document_output", "tile_b"))
def _triplet_forward(x_query, x_pos, x_neg, query_params, document_params,
                     n_query_output, n_document_output, tile_b=512):
    qw1, qb1, qw2, qb2, qw3, qb3 = query_params
    dw1, db1, dw2, db2, dw3, db3 = document_params

    batch = x_query.shape[0]
    nq_in = x_query.shape[1]
    nd_in = x_pos.shape[1]
    n_hidden = qw1.shape[1]
    nq_out_p = qw3.shape[1]  # final layers pre-padded to a multiple of 128 lanes
    nd_out_p = dw3.shape[1]

    tb, padded_b = _choose_tiling(batch, tile_b)
    pad = padded_b - batch
    if pad:
        x_query = jnp.pad(x_query, ((0, pad), (0, 0)))
        x_pos = jnp.pad(x_pos, ((0, pad), (0, 0)))
        x_neg = jnp.pad(x_neg, ((0, pad), (0, 0)))
    grid = (padded_b // tb,)

    act = lambda n_in: pl.BlockSpec((tb, n_in), lambda i: (i, 0))     # batch-tiled
    const = lambda a: pl.BlockSpec(a.shape, lambda i: (0, 0))         # VMEM-resident
    out_spec = lambda n_o: pl.BlockSpec((tb, n_o), lambda i: (i, 0))  # lane-dense

    weight_bytes = sum(int(a.size) * a.dtype.itemsize for a in
                       (qw1, qb1, qw2, qb2, qw3, qb3,
                        dw1, db1, dw2, db2, dw3, db3))
    in_bytes = sum(int(a.size) * a.dtype.itemsize for a in (x_query, x_pos, x_neg))
    out_bytes = padded_b * (nq_out_p + 2 * nd_out_p) * 2  # bf16 stores
    flops = 2 * padded_b * (
        (nq_in * n_hidden + n_hidden * n_hidden + n_hidden * nq_out_p)
        + 2 * (nd_in * n_hidden + n_hidden * n_hidden + n_hidden * nd_out_p))
    cost = pl.CostEstimate(flops=int(flops),
                           transcendentals=int(3 * 2 * padded_b * n_hidden),
                           bytes_accessed=int(in_bytes + weight_bytes + out_bytes))

    oq, op_, on_ = pl.pallas_call(
        _triplet_kernel,
        grid=grid,
        in_specs=[
            act(nq_in), act(nd_in), act(nd_in),
            const(qw1), const(qb1), const(qw2), const(qb2), const(qw3), const(qb3),
            const(dw1), const(db1), const(dw2), const(db2), const(dw3), const(db3),
        ],
        out_specs=[out_spec(nq_out_p), out_spec(nd_out_p), out_spec(nd_out_p)],
        out_shape=(
            jax.ShapeDtypeStruct((padded_b, nq_out_p), jnp.bfloat16),
            jax.ShapeDtypeStruct((padded_b, nd_out_p), jnp.bfloat16),
            jax.ShapeDtypeStruct((padded_b, nd_out_p), jnp.bfloat16),
        ),
        compiler_params=pltpu.CompilerParams(
            dimension_semantics=("parallel",),          # batch tiles shardable (v7x 2 TCs)
            vmem_limit_bytes=32 * 1024 * 1024,          # safe within v7x's 64 MiB VMEM
        ),
        cost_estimate=cost,
    )(x_query, x_pos, x_neg,
      qw1, qb1, qw2, qb2, qw3, qb3,
      dw1, db1, dw2, db2, dw3, db3)

    # Slice off batch/lane padding; cast the tiny real embeddings back to f32.
    q_emb = oq[:batch, :n_query_output].astype(jnp.float32)
    p_emb = op_[:batch, :n_document_output].astype(jnp.float32)
    n_emb = on_[:batch, :n_document_output].astype(jnp.float32)
    return q_emb, p_emb, n_emb


def init_nn_model_params(key, n_input, n_output, n_hidden=256):
    """Deterministic init matching NNModel's layer shapes (weights stored as (in, out))."""
    keys = jax.random.split(key, 6)

    def linear(kw, kb, n_in, n_o):
        bound = 1.0 / math.sqrt(n_in)
        w = jax.random.uniform(kw, (n_in, n_o), jnp.float32, -bound, bound)
        b = jax.random.uniform(kb, (1, n_o), jnp.float32, -bound, bound)
        return w, b

    w1, b1 = linear(keys[0], keys[1], n_input, n_hidden)
    w2, b2 = linear(keys[2], keys[3], n_hidden, n_hidden)
    w3, b3 = linear(keys[4], keys[5], n_hidden, n_output)

    # Pad the final layer to a lane-dense (multiple of 128) output width so the kernel's
    # output stores are unmasked full-vreg stores; the wrapper slices the padding back.
    n_out_p = _round_up(n_output, _LANE)
    w3p = jnp.pad(w3, ((0, 0), (0, n_out_p - n_output)))
    b3p = jnp.pad(b3, ((0, 0), (0, n_out_p - n_output)))

    # bf16 weights: half the HBM weight traffic + bf16 MXU fast path. Biases stay f32.
    return (w1.astype(jnp.bfloat16), b1,
            w2.astype(jnp.bfloat16), b2,
            w3p.astype(jnp.bfloat16), b3p)


class TripletModelPallas:
    """Pallas equivalent of TripletModel: a query MLP and a shared document MLP."""

    def __init__(self, key, n_query_input, n_document_input,
                 n_query_output, n_document_output):
        kq, kd = jax.random.split(key)
        self.n_query_output = n_query_output
        self.n_document_output = n_document_output
        self.query_params = init_nn_model_params(kq, n_query_input, n_query_output)
        self.document_params = init_nn_model_params(kd, n_document_input, n_document_output)

    def __call__(self, x_query, x_positive_document, x_negative_document):
        assert (x_query.shape[0] == x_positive_document.shape[0]
                == x_negative_document.shape[0]), "triplet inputs must share batch size"
        return _triplet_forward(
            x_query, x_positive_document, x_negative_document,
            self.query_params, self.document_params,
            self.n_query_output, self.n_document_output)


def _reference_mlp(x, params, n_out):
    """Pure-JAX reference with the same bf16-operand / f32-accumulate recipe."""
    w1, b1, w2, b2, w3p, b3p = params
    h1 = jax.nn.sigmoid(
        jnp.dot(x.astype(jnp.bfloat16), w1, preferred_element_type=jnp.float32) + b1)
    h2 = jax.nn.sigmoid(
        jnp.dot(h1.astype(jnp.bfloat16), w2, preferred_element_type=jnp.float32) + b2)
    out = jnp.dot(h2.astype(jnp.bfloat16), w3p, preferred_element_type=jnp.float32) + b3p
    return out[:, :n_out]


if __name__ == "__main__":
    key = jax.random.PRNGKey(0)
    k_model, k_q, k_p, k_n = jax.random.split(key, 4)

    batch = 2
    n_query_input, n_document_input = 32, 48
    n_query_output, n_document_output = 16, 16

    model = TripletModelPallas(k_model, n_query_input, n_document_input,
                               n_query_output, n_document_output)

    x_query = jax.random.normal(k_q, (batch, n_query_input), jnp.float32)
    x_pos = jax.random.normal(k_p, (batch, n_document_input), jnp.float32)
    x_neg = jax.random.normal(k_n, (batch, n_document_input), jnp.float32)

    q_emb, p_emb, n_emb = model(x_query, x_pos, x_neg)
    jax.block_until_ready((q_emb, p_emb, n_emb))

    # Sanity-check against a pure-JAX reference (same bf16 matmul recipe; tolerance
    # covers the bf16 output store + EUP approx-reciprocal sigmoid).
    q_ref = _reference_mlp(x_query, model.query_params, n_query_output)
    p_ref = _reference_mlp(x_pos, model.document_params, n_document_output)
    n_ref = _reference_mlp(x_neg, model.document_params, n_document_output)

    assert q_emb.shape == (batch, n_query_output)
    assert p_emb.shape == (batch, n_document_output)
    assert n_emb.shape == (batch, n_document_output)
    assert jnp.allclose(q_emb, q_ref, atol=2e-2, rtol=2e-2)
    assert jnp.allclose(p_emb, p_ref, atol=2e-2, rtol=2e-2)
    assert jnp.allclose(n_emb, n_ref, atol=2e-2, rtol=2e-2)

    print("KERNEL_OK")
</pallas_src>

<mosaic_0001>
module attributes {stable_mosaic.version = 11 : i64} {
  func.func @_triplet_kernel(%arg0: i32, %arg1: memref<8x32xf32, #tpu.memory_space<vmem>>, %arg2: memref<8x48xf32, #tpu.memory_space<vmem>>, %arg3: memref<8x48xf32, #tpu.memory_space<vmem>>, %arg4: memref<32x256xbf16, #tpu.memory_space<vmem>>, %arg5: memref<1x256xf32, #tpu.memory_space<vmem>>, %arg6: memref<256x256xbf16, #tpu.memory_space<vmem>>, %arg7: memref<1x256xf32, #tpu.memory_space<vmem>>, %arg8: memref<256x128xbf16, #tpu.memory_space<vmem>>, %arg9: memref<1x128xf32, #tpu.memory_space<vmem>>, %arg10: memref<48x256xbf16, #tpu.memory_space<vmem>>, %arg11: memref<1x256xf32, #tpu.memory_space<vmem>>, %arg12: memref<256x256xbf16, #tpu.memory_space<vmem>>, %arg13: memref<1x256xf32, #tpu.memory_space<vmem>>, %arg14: memref<256x128xbf16, #tpu.memory_space<vmem>>, %arg15: memref<1x128xf32, #tpu.memory_space<vmem>>, %arg16: memref<8x128xbf16, #tpu.memory_space<vmem>>, %arg17: memref<8x128xbf16, #tpu.memory_space<vmem>>, %arg18: memref<8x128xbf16, #tpu.memory_space<vmem>>) attributes {dimension_semantics = [#tpu.dimension_semantics<parallel>], iteration_bounds = array<i64: 1>, scalar_prefetch = 0 : i64, scratch_operands = 0 : i64, tpu.core_type = #tpu.core_type<tc>, window_params = [{transform_indices = @transform_0, window_bounds = array<i64: 8, 32>}, {transform_indices = @transform_1, window_bounds = array<i64: 8, 48>}, {transform_indices = @transform_2, window_bounds = array<i64: 8, 48>}, {pipeline_mode = #tpu.pipeline_mode<synchronous>, transform_indices = @transform_3, window_bounds = array<i64: 32, 256>}, {pipeline_mode = #tpu.pipeline_mode<synchronous>, transform_indices = @transform_4, window_bounds = array<i64: 1, 256>}, {pipeline_mode = #tpu.pipeline_mode<synchronous>, transform_indices = @transform_5, window_bounds = array<i64: 256, 256>}, {pipeline_mode = #tpu.pipeline_mode<synchronous>, transform_indices = @transform_6, window_bounds = array<i64: 1, 256>}, {pipeline_mode = #tpu.pipeline_mode<synchronous>, transform_indices = @transform_7, window_bounds = array<i64: 256, 128>}, {pipeline_mode = #tpu.pipeline_mode<synchronous>, transform_indices = @transform_8, window_bounds = array<i64: 1, 128>}, {pipeline_mode = #tpu.pipeline_mode<synchronous>, transform_indices = @transform_9, window_bounds = array<i64: 48, 256>}, {pipeline_mode = #tpu.pipeline_mode<synchronous>, transform_indices = @transform_10, window_bounds = array<i64: 1, 256>}, {pipeline_mode = #tpu.pipeline_mode<synchronous>, transform_indices = @transform_11, window_bounds = array<i64: 256, 256>}, {pipeline_mode = #tpu.pipeline_mode<synchronous>, transform_indices = @transform_12, window_bounds = array<i64: 1, 256>}, {pipeline_mode = #tpu.pipeline_mode<synchronous>, transform_indices = @transform_13, window_bounds = array<i64: 256, 128>}, {pipeline_mode = #tpu.pipeline_mode<synchronous>, transform_indices = @transform_14, window_bounds = array<i64: 1, 128>}, {transform_indices = @transform_15, window_bounds = array<i64: 8, 128>}, {transform_indices = @transform_16, window_bounds = array<i64: 8, 128>}, {transform_indices = @transform_17, window_bounds = array<i64: 8, 128>}]} {
    %c0 = arith.constant 0 : index
    %c0_0 = arith.constant 0 : index
    %0 = vector.load %arg1[%c0, %c0_0] : memref<8x32xf32, #tpu.memory_space<vmem>>, vector<8x32xf32>
    %1 = arith.truncf %0 : vector<8x32xf32> to vector<8x32xbf16>
    %c0_1 = arith.constant 0 : index
    %c0_2 = arith.constant 0 : index
    %2 = vector.load %arg4[%c0_1, %c0_2] : memref<32x256xbf16, #tpu.memory_space<vmem>>, vector<32x256xbf16>
    %cst = arith.constant dense<0.000000e+00> : vector<8x256xf32>
    %3 = tpu.matmul %1, %2, %cst {dimension_numbers = #tpu.dot_dimension_numbers<[1], [0], [0], [1], [0, 0, 1, 1], [], []>} : vector<8x32xbf16>, vector<32x256xbf16>, vector<8x256xf32> -> vector<8x256xf32>
    %c0_3 = arith.constant 0 : index
    %c0_4 = arith.constant 0 : index
    %4 = vector.load %arg5[%c0_3, %c0_4] : memref<1x256xf32, #tpu.memory_space<vmem>>, vector<1x256xf32>
    %5 = vector.broadcast %4 : vector<1x256xf32> to vector<8x256xf32>
    %6 = arith.addf %3, %5 : vector<8x256xf32>
    %cst_5 = arith.constant 0.000000e+00 : f32
    %7 = vector.broadcast %cst_5 : f32 to vector<8x256xf32>
    %8 = arith.subf %7, %6 : vector<8x256xf32>
    %9 = math.exp %8 : vector<8x256xf32>
    %cst_6 = arith.constant 1.000000e+00 : f32
    %10 = vector.broadcast %cst_6 : f32 to vector<8x256xf32>
    %11 = arith.addf %10, %9 : vector<8x256xf32>
    %12 = tpu.reciprocal %11 {approx = true} : vector<8x256xf32> -> vector<8x256xf32>
    %13 = arith.truncf %12 : vector<8x256xf32> to vector<8x256xbf16>
    %c0_7 = arith.constant 0 : index
    %c0_8 = arith.constant 0 : index
    %14 = vector.load %arg6[%c0_7, %c0_8] : memref<256x256xbf16, #tpu.memory_space<vmem>>, vector<256x256xbf16>
    %cst_9 = arith.constant dense<0.000000e+00> : vector<8x256xf32>
    %15 = tpu.matmul %13, %14, %cst_9 {dimension_numbers = #tpu.dot_dimension_numbers<[1], [0], [0], [1], [0, 0, 1, 1], [], []>} : vector<8x256xbf16>, vector<256x256xbf16>, vector<8x256xf32> -> vector<8x256xf32>
    %c0_10 = arith.constant 0 : index
    %c0_11 = arith.constant 0 : index
    %16 = vector.load %arg7[%c0_10, %c0_11] : memref<1x256xf32, #tpu.memory_space<vmem>>, vector<1x256xf32>
    %17 = vector.broadcast %16 : vector<1x256xf32> to vector<8x256xf32>
    %18 = arith.addf %15, %17 : vector<8x256xf32>
    %cst_12 = arith.constant 0.000000e+00 : f32
    %19 = vector.broadcast %cst_12 : f32 to vector<8x256xf32>
    %20 = arith.subf %19, %18 : vector<8x256xf32>
    %21 = math.exp %20 : vector<8x256xf32>
    %cst_13 = arith.constant 1.000000e+00 : f32
    %22 = vector.broadcast %cst_13 : f32 to vector<8x256xf32>
    %23 = arith.addf %22, %21 : vector<8x256xf32>
    %24 = tpu.reciprocal %23 {approx = true} : vector<8x256xf32> -> vector<8x256xf32>
    %25 = arith.truncf %24 : vector<8x256xf32> to vector<8x256xbf16>
    %c0_14 = arith.constant 0 : index
    %c0_15 = arith.constant 0 : index
    %26 = vector.load %arg8[%c0_14, %c0_15] : memref<256x128xbf16, #tpu.memory_space<vmem>>, vector<256x128xbf16>
    %cst_16 = arith.constant dense<0.000000e+00> : vector<8x128xf32>
    %27 = tpu.matmul %25, %26, %cst_16 {dimension_numbers = #tpu.dot_dimension_numbers<[1], [0], [0], [1], [0, 0, 1, 1], [], []>} : vector<8x256xbf16>, vector<256x128xbf16>, vector<8x128xf32> -> vector<8x128xf32>
    %c0_17 = arith.constant 0 : index
    %c0_18 = arith.constant 0 : index
    %28 = vector.load %arg9[%c0_17, %c0_18] : memref<1x128xf32, #tpu.memory_space<vmem>>, vector<1x128xf32>
    %29 = vector.broadcast %28 : vector<1x128xf32> to vector<8x128xf32>
    %30 = arith.addf %27, %29 : vector<8x128xf32>
    %31 = arith.truncf %30 : vector<8x128xf32> to vector<8x128xbf16>
    %c0_19 = arith.constant 0 : index
    %c0_20 = arith.constant 0 : index
    %32 = vector.load %arg16[%c0_19, %c0_20] : memref<8x128xbf16, #tpu.memory_space<vmem>>, vector<8x128xbf16>
    tpu.vector_store %arg16[%c0_19, %c0_20], %31 {strides = array<i32>} : memref<8x128xbf16, #tpu.memory_space<vmem>>, vector<8x128xbf16>,
    %c0_21 = arith.constant 0 : index
    %c0_22 = arith.constant 0 : index
    %33 = vector.load %arg2[%c0_21, %c0_22] : memref<8x48xf32, #tpu.memory_space<vmem>>, vector<8x48xf32>
    %34 = arith.truncf %33 : vector<8x48xf32> to vector<8x48xbf16>
    %c0_23 = arith.constant 0 : index
    %c0_24 = arith.constant 0 : index
    %35 = vector.load %arg10[%c0_23, %c0_24] : memref<48x256xbf16, #tpu.memory_space<vmem>>, vector<48x256xbf16>
    %cst_25 = arith.constant dense<0.000000e+00> : vector<8x256xf32>
    %36 = tpu.matmul %34, %35, %cst_25 {dimension_numbers = #tpu.dot_dimension_numbers<[1], [0], [0], [1], [0, 0, 1, 1], [], []>} : vector<8x48xbf16>, vector<48x256xbf16>, vector<8x256xf32> -> vector<8x256xf32>
    %c0_26 = arith.constant 0 : index
    %c0_27 = arith.constant 0 : index
    %37 = vector.load %arg11[%c0_26, %c0_27] : memref<1x256xf32, #tpu.memory_space<vmem>>, vector<1x256xf32>
    %38 = vector.broadcast %37 : vector<1x256xf32> to vector<8x256xf32>
    %39 = arith.addf %36, %38 : vector<8x256xf32>
    %cst_28 = arith.constant 0.000000e+00 : f32
    %40 = vector.broadcast %cst_28 : f32 to vector<8x256xf32>
    %41 = arith.subf %40, %39 : vector<8x256xf32>
    %42 = math.exp %41 : vector<8x256xf32>
    %cst_29 = arith.constant 1.000000e+00 : f32
    %43 = vector.broadcast %cst_29 : f32 to vector<8x256xf32>
    %44 = arith.addf %43, %42 : vector<8x256xf32>
    %45 = tpu.reciprocal %44 {approx = true} : vector<8x256xf32> -> vector<8x256xf32>
    %46 = arith.truncf %45 : vector<8x256xf32> to vector<8x256xbf16>
    %c0_30 = arith.constant 0 : index
    %c0_31 = arith.constant 0 : index
    %47 = vector.load %arg12[%c0_30, %c0_31] : memref<256x256xbf16, #tpu.memory_space<vmem>>, vector<256x256xbf16>
    %cst_32 = arith.constant dense<0.000000e+00> : vector<8x256xf32>
    %48 = tpu.matmul %46, %47, %cst_32 {dimension_numbers = #tpu.dot_dimension_numbers<[1], [0], [0], [1], [0, 0, 1, 1], [], []>} : vector<8x256xbf16>, vector<256x256xbf16>, vector<8x256xf32> -> vector<8x256xf32>
    %c0_33 = arith.constant 0 : index
    %c0_34 = arith.constant 0 : index
    %49 = vector.load %arg13[%c0_33, %c0_34] : memref<1x256xf32, #tpu.memory_space<vmem>>, vector<1x256xf32>
    %50 = vector.broadcast %49 : vector<1x256xf32> to vector<8x256xf32>
    %51 = arith.addf %48, %50 : vector<8x256xf32>
    %cst_35 = arith.constant 0.000000e+00 : f32
    %52 = vector.broadcast %cst_35 : f32 to vector<8x256xf32>
    %53 = arith.subf %52, %51 : vector<8x256xf32>
    %54 = math.exp %53 : vector<8x256xf32>
    %cst_36 = arith.constant 1.000000e+00 : f32
    %55 = vector.broadcast %cst_36 : f32 to vector<8x256xf32>
    %56 = arith.addf %55, %54 : vector<8x256xf32>
    %57 = tpu.reciprocal %56 {approx = true} : vector<8x256xf32> -> vector<8x256xf32>
    %58 = arith.truncf %57 : vector<8x256xf32> to vector<8x256xbf16>
    %c0_37 = arith.constant 0 : index
    %c0_38 = arith.constant 0 : index
    %59 = vector.load %arg14[%c0_37, %c0_38] : memref<256x128xbf16, #tpu.memory_space<vmem>>, vector<256x128xbf16>
    %cst_39 = arith.constant dense<0.000000e+00> : vector<8x128xf32>
    %60 = tpu.matmul %58, %59, %cst_39 {dimension_numbers = #tpu.dot_dimension_numbers<[1], [0], [0], [1], [0, 0, 1, 1], [], []>} : vector<8x256xbf16>, vector<256x128xbf16>, vector<8x128xf32> -> vector<8x128xf32>
    %c0_40 = arith.constant 0 : index
    %c0_41 = arith.constant 0 : index
    %61 = vector.load %arg15[%c0_40, %c0_41] : memref<1x128xf32, #tpu.memory_space<vmem>>, vector<1x128xf32>
    %62 = vector.broadcast %61 : vector<1x128xf32> to vector<8x128xf32>
    %63 = arith.addf %60, %62 : vector<8x128xf32>
    %64 = arith.truncf %63 : vector<8x128xf32> to vector<8x128xbf16>
    %c0_42 = arith.constant 0 : index
    %c0_43 = arith.constant 0 : index
    %65 = vector.load %arg17[%c0_42, %c0_43] : memref<8x128xbf16, #tpu.memory_space<vmem>>, vector<8x128xbf16>
    tpu.vector_store %arg17[%c0_42, %c0_43], %64 {strides = array<i32>} : memref<8x128xbf16, #tpu.memory_space<vmem>>, vector<8x128xbf16>,
    %c0_44 = arith.constant 0 : index
    %c0_45 = arith.constant 0 : index
    %66 = vector.load %arg3[%c0_44, %c0_45] : memref<8x48xf32, #tpu.memory_space<vmem>>, vector<8x48xf32>
    %67 = arith.truncf %66 : vector<8x48xf32> to vector<8x48xbf16>
    %c0_46 = arith.constant 0 : index
    %c0_47 = arith.constant 0 : index
    %68 = vector.load %arg10[%c0_46, %c0_47] : memref<48x256xbf16, #tpu.memory_space<vmem>>, vector<48x256xbf16>
    %cst_48 = arith.constant dense<0.000000e+00> : vector<8x256xf32>
    %69 = tpu.matmul %67, %68, %cst_48 {dimension_numbers = #tpu.dot_dimension_numbers<[1], [0], [0], [1], [0, 0, 1, 1], [], []>} : vector<8x48xbf16>, vector<48x256xbf16>, vector<8x256xf32> -> vector<8x256xf32>
    %c0_49 = arith.constant 0 : index
    %c0_50 = arith.constant 0 : index
    %70 = vector.load %arg11[%c0_49, %c0_50] : memref<1x256xf32, #tpu.memory_space<vmem>>, vector<1x256xf32>
    %71 = vector.broadcast %70 : vector<1x256xf32> to vector<8x256xf32>
    %72 = arith.addf %69, %71 : vector<8x256xf32>
    %cst_51 = arith.constant 0.000000e+00 : f32
    %73 = vector.broadcast %cst_51 : f32 to vector<8x256xf32>
    %74 = arith.subf %73, %72 : vector<8x256xf32>
    %75 = math.exp %74 : vector<8x256xf32>
    %cst_52 = arith.constant 1.000000e+00 : f32
    %76 = vector.broadcast %cst_52 : f32 to vector<8x256xf32>
    %77 = arith.addf %76, %75 : vector<8x256xf32>
    %78 = tpu.reciprocal %77 {approx = true} : vector<8x256xf32> -> vector<8x256xf32>
    %79 = arith.truncf %78 : vector<8x256xf32> to vector<8x256xbf16>
    %c0_53 = arith.constant 0 : index
    %c0_54 = arith.constant 0 : index
    %80 = vector.load %arg12[%c0_53, %c0_54] : memref<256x256xbf16, #tpu.memory_space<vmem>>, vector<256x256xbf16>
    %cst_55 = arith.constant dense<0.000000e+00> : vector<8x256xf32>
    %81 = tpu.matmul %79, %80, %cst_55 {dimension_numbers = #tpu.dot_dimension_numbers<[1], [0], [0], [1], [0, 0, 1, 1], [], []>} : vector<8x256xbf16>, vector<256x256xbf16>, vector<8x256xf32> -> vector<8x256xf32>
    %c0_56 = arith.constant 0 : index
    %c0_57 = arith.constant 0 : index
    %82 = vector.load %arg13[%c0_56, %c0_57] : memref<1x256xf32, #tpu.memory_space<vmem>>, vector<1x256xf32>
    %83 = vector.broadcast %82 : vector<1x256xf32> to vector<8x256xf32>
    %84 = arith.addf %81, %83 : vector<8x256xf32>
    %cst_58 = arith.constant 0.000000e+00 : f32
    %85 = vector.broadcast %cst_58 : f32 to vector<8x256xf32>
    %86 = arith.subf %85, %84 : vector<8x256xf32>
    %87 = math.exp %86 : vector<8x256xf32>
    %cst_59 = arith.constant 1.000000e+00 : f32
    %88 = vector.broadcast %cst_59 : f32 to vector<8x256xf32>
    %89 = arith.addf %88, %87 : vector<8x256xf32>
    %90 = tpu.reciprocal %89 {approx = true} : vector<8x256xf32> -> vector<8x256xf32>
    %91 = arith.truncf %90 : vector<8x256xf32> to vector<8x256xbf16>
    %c0_60 = arith.constant 0 : index
    %c0_61 = arith.constant 0 : index
    %92 = vector.load %arg14[%c0_60, %c0_61] : memref<256x128xbf16, #tpu.memory_space<vmem>>, vector<256x128xbf16>
    %cst_62 = arith.constant dense<0.000000e+00> : vector<8x128xf32>
    %93 = tpu.matmul %91, %92, %cst_62 {dimension_numbers = #tpu.dot_dimension_numbers<[1], [0], [0], [1], [0, 0, 1, 1], [], []>} : vector<8x256xbf16>, vector<256x128xbf16>, vector<8x128xf32> -> vector<8x128xf32>
    %c0_63 = arith.constant 0 : index
    %c0_64 = arith.constant 0 : index
    %94 = vector.load %arg15[%c0_63, %c0_64] : memref<1x128xf32, #tpu.memory_space<vmem>>, vector<1x128xf32>
    %95 = vector.broadcast %94 : vector<1x128xf32> to vector<8x128xf32>
    %96 = arith.addf %93, %95 : vector<8x128xf32>
    %97 = arith.truncf %96 : vector<8x128xf32> to vector<8x128xbf16>
    %c0_65 = arith.constant 0 : index
    %c0_66 = arith.constant 0 : index
    %98 = vector.load %arg18[%c0_65, %c0_66] : memref<8x128xbf16, #tpu.memory_space<vmem>>, vector<8x128xbf16>
    tpu.vector_store %arg18[%c0_65, %c0_66], %97 {strides = array<i32>} : memref<8x128xbf16, #tpu.memory_space<vmem>>, vector<8x128xbf16>,
    return
  }
  func.func @transform_0(%arg0: i32) -> (i32, i32) {
    %c0_i32 = arith.constant 0 : i32
    %c0_i32_0 = arith.constant 0 : i32
    return %arg0, %c0_i32 : i32, i32
  }
  func.func @transform_1(%arg0: i32) -> (i32, i32) {
    %c0_i32 = arith.constant 0 : i32
    %c0_i32_0 = arith.constant 0 : i32
    return %arg0, %c0_i32 : i32, i32
  }
  func.func @transform_2(%arg0: i32) -> (i32, i32) {
    %c0_i32 = arith.constant 0 : i32
    %c0_i32_0 = arith.constant 0 : i32
    return %arg0, %c0_i32 : i32, i32
  }
  func.func @transform_3(%arg0: i32) -> (i32, i32) {
    %c0_i32 = arith.constant 0 : i32
    %c0_i32_0 = arith.constant 0 : i32
    %c0_i32_1 = arith.constant 0 : i32
    return %c0_i32, %c0_i32_0 : i32, i32
  }
  func.func @transform_4(%arg0: i32) -> (i32, i32) {
    %c0_i32 = arith.constant 0 : i32
    %c0_i32_0 = arith.constant 0 : i32
    %c0_i32_1 = arith.constant 0 : i32
    return %c0_i32, %c0_i32_0 : i32, i32
  }
  func.func @transform_5(%arg0: i32) -> (i32, i32) {
    %c0_i32 = arith.constant 0 : i32
    %c0_i32_0 = arith.constant 0 : i32
    %c0_i32_1 = arith.constant 0 : i32
    return %c0_i32, %c0_i32_0 : i32, i32
  }
  func.func @transform_6(%arg0: i32) -> (i32, i32) {
    %c0_i32 = arith.constant 0 : i32
    %c0_i32_0 = arith.constant 0 : i32
    %c0_i32_1 = arith.constant 0 : i32
    return %c0_i32, %c0_i32_0 : i32, i32
  }
  func.func @transform_7(%arg0: i32) -> (i32, i32) {
    %c0_i32 = arith.constant 0 : i32
    %c0_i32_0 = arith.constant 0 : i32
    %c0_i32_1 = arith.constant 0 : i32
    return %c0_i32, %c0_i32_0 : i32, i32
  }
  func.func @transform_8(%arg0: i32) -> (i32, i32) {
    %c0_i32 = arith.constant 0 : i32
    %c0_i32_0 = arith.constant 0 : i32
    %c0_i32_1 = arith.constant 0 : i32
    return %c0_i32, %c0_i32_0 : i32, i32
  }
  func.func @transform_9(%arg0: i32) -> (i32, i32) {
    %c0_i32 = arith.constant 0 : i32
    %c0_i32_0 = arith.constant 0 : i32
    %c0_i32_1 = arith.constant 0 : i32
    return %c0_i32, %c0_i32_0 : i32, i32
  }
  func.func @transform_10(%arg0: i32) -> (i32, i32) {
    %c0_i32 = arith.constant 0 : i32
    %c0_i32_0 = arith.constant 0 : i32
    %c0_i32_1 = arith.constant 0 : i32
    return %c0_i32, %c0_i32_0 : i32, i32
  }
  func.func @transform_11(%arg0: i32) -> (i32, i32) {
    %c0_i32 = arith.constant 0 : i32
    %c0_i32_0 = arith.constant 0 : i32
    %c0_i32_1 = arith.constant 0 : i32
    return %c0_i32, %c0_i32_0 : i32, i32
  }
  func.func @transform_12(%arg0: i32) -> (i32, i32) {
    %c0_i32 = arith.constant 0 : i32
    %c0_i32_0 = arith.constant 0 : i32
    %c0_i32_1 = arith.constant 0 : i32
    return %c0_i32, %c0_i32_0 : i32, i32
  }
  func.func @transform_13(%arg0: i32) -> (i32, i32) {
    %c0_i32 = arith.constant 0 : i32
    %c0_i32_0 = arith.constant 0 : i32
    %c0_i32_1 = arith.constant 0 : i32
    return %c0_i32, %c0_i32_0 : i32, i32
  }
  func.func @transform_14(%arg0: i32) -> (i32, i32) {
    %c0_i32 = arith.constant 0 : i32
    %c0_i32_0 = arith.constant 0 : i32
    %c0_i32_1 = arith.constant 0 : i32
    return %c0_i32, %c0_i32_0 : i32, i32
  }
  func.func @transform_15(%arg0: i32) -> (i32, i32) {
    %c0_i32 = arith.constant 0 : i32
    %c0_i32_0 = arith.constant 0 : i32
    return %arg0, %c0_i32 : i32, i32
  }
  func.func @transform_16(%arg0: i32) -> (i32, i32) {
    %c0_i32 = arith.constant 0 : i32
    %c0_i32_0 = arith.constant 0 : i32
    return %arg0, %c0_i32 : i32, i32
  }
  func.func @transform_17(%arg0: i32) -> (i32, i32) {
    %c0_i32 = arith.constant 0 : i32
    %c0_i32_0 = arith.constant 0 : i32
    return %arg0, %c0_i32 : i32, i32
  }
}

</mosaic_0001>

<llo_original>
// kernel: _triplet_forward.1
$region0: #{_triplet_forward.1}
  #allocation0 [shape = 'u32[]', space=smem, size = 0x4, offset = 0x4, fixed_abs, tag = 'smem constant byte address 0x4 - core index']
  #allocation1 [shape = 'u32[72,128]{1,0:T(1,128)}', space=vmem, size = 0x9000, scoped, tag = 'internal scratch']
  %s0 = inlined_call_operand.vmem [shape: f32[8,32], index: 0, kind: input, shape index: {}]
  %s1 = inlined_call_operand.vmem [shape: f32[8,48], index: 1, kind: input, shape index: {}]
  %s2 = inlined_call_operand.vmem [shape: f32[8,48], index: 2, kind: input, shape index: {}]
  %s3 = inlined_call_operand.vmem [shape: bf16[32,256], index: 3, kind: input, shape index: {}]
  %s4 = inlined_call_operand.vmem [shape: f32[1,256], index: 4, kind: input, shape index: {}]
  %s5 = inlined_call_operand.hbm [shape: bf16[256,256], index: 5, kind: input, shape index: {}]
  %s6 = inlined_call_operand.vmem [shape: f32[1,256], index: 6, kind: input, shape index: {}]
  %s7 = inlined_call_operand.hbm [shape: bf16[256,128], index: 7, kind: input, shape index: {}]
  %s8 = inlined_call_operand.hbm [shape: f32[1,128], index: 8, kind: input, shape index: {}]
  %s9 = inlined_call_operand.hbm [shape: bf16[48,256], index: 9, kind: input, shape index: {}]
  %s10 = inlined_call_operand.vmem [shape: f32[1,256], index: 10, kind: input, shape index: {}]
  %s11 = inlined_call_operand.hbm [shape: bf16[256,256], index: 11, kind: input, shape index: {}]
  %s12 = inlined_call_operand.vmem [shape: f32[1,256], index: 12, kind: input, shape index: {}]
  %s13 = inlined_call_operand.hbm [shape: bf16[256,128], index: 13, kind: input, shape index: {}]
  %s14 = inlined_call_operand.vmem [shape: f32[1,128], index: 14, kind: input, shape index: {}]
  %s15 = inlined_call_operand.vmem [shape: bf16[8,128], index: 15, kind: output, shape index: {0}]
  %s16 = inlined_call_operand.vmem [shape: bf16[8,128], index: 16, kind: output, shape index: {1}]
  %s17 = inlined_call_operand.vmem [shape: bf16[8,128], index: 17, kind: output, shape index: {2}]
  %18 = xla_tuple %s15, %s16, %s17
  %s19 = sld [smem:[#allocation0]]
  $region110: #{_triplet_forward.1} parent=0
    _
  %s21 = ssub.s32 1, %s19
  %s22 = scalar_select 0, %s21, %s19
  $region1: #{_triplet_forward.1} parent=0
    #allocation2 [shape = 'u8[131072]{0}', space=vmem, size = 0x20000, scoped, tag = 'input window, operand 5, single buffered']
    #allocation3 [shape = 's32[1]{0}', space=sflag, size = 0x4, scoped, tag = 'scoped memory for _triplet_forward.1']
    #allocation4 [shape = 'u8[65536]{0}', space=vmem, size = 0x10000, scoped, tag = 'input window, operand 7, single buffered']
    #allocation5 [shape = 's32[1]{0}', space=sflag, size = 0x4, scoped, tag = 'scoped memory for _triplet_forward.1']
    #allocation6 [shape = 'u8[512]{0}', space=vmem, size = 0x400, scoped, tag = 'input window, operand 8, single buffered']
    #allocation7 [shape = 'u8[24576]{0}', space=vmem, size = 0x6000, scoped, tag = 'input window, operand 9, single buffered']
    #allocation8 [shape = 's32[1]{0}', space=sflag, size = 0x4, scoped, tag = 'scoped memory for _triplet_forward.1']
    #allocation9 [shape = 'u8[131072]{0}', space=vmem, size = 0x20000, scoped, tag = 'input window, operand 11, single buffered']
    #allocation10 [shape = 'u8[65536]{0}', space=vmem, size = 0x10000, scoped, tag = 'input window, operand 13, single buffered']
    #allocation11 [shape = 's32[1]{0}', space=sflag, size = 0x4, scoped, tag = 'scoped memory for _triplet_forward.1']
    %23 = vsyncpa [#allocation3], 0
    %24 = vsyncpa [#allocation5], 0
    %25 = vsyncpa [#allocation8], 0
    %26 = vsyncpa [#allocation11], 0
    // Predicated region
    $region2: #{_triplet_forward.1} parent=1 // pred_check
      _
    $region3: #{_triplet_forward.1} parent=1 // pred_check_branch
      %28 = sbr.rel (0) target = $region5
    $region4: #{_triplet_forward.1} parent=1 // pred_region
      _
    $region5: #{_triplet_forward.1} parent=1 // pred_fallthru
      _
    // Predicated region
    $region6: #{_triplet_forward.1} parent=1 // pred_check
      _
    $region7: #{_triplet_forward.1} parent=1 // pred_check_branch
      %30 = sbr.rel (0) target = $region9
    $region8: #{_triplet_forward.1} parent=1 // pred_region
      _
    $region9: #{_triplet_forward.1} parent=1 // pred_fallthru
      _
    // Predicated region
    $region10: #{_triplet_forward.1} parent=1 // pred_check
      _
    $region11: #{_triplet_forward.1} parent=1 // pred_check_branch
      %32 = sbr.rel (0) target = $region13
    $region12: #{_triplet_forward.1} parent=1 // pred_region
      _
    $region13: #{_triplet_forward.1} parent=1 // pred_fallthru
      _
    // Predicated region
    $region14: #{_triplet_forward.1} parent=1 // pred_check
      _
    $region15: #{_triplet_forward.1} parent=1 // pred_check_branch
      %34 = sbr.rel (0) target = $region17
    $region16: #{_triplet_forward.1} parent=1 // pred_region
      _
    $region17: #{_triplet_forward.1} parent=1 // pred_fallthru
      _
    // Predicated region
    $region18: #{_triplet_forward.1} parent=1 // pred_check
      _
    $region19: #{_triplet_forward.1} parent=1 // pred_check_branch
      %36 = sbr.rel (0) target = $region21
    $region20: #{_triplet_forward.1} parent=1 // pred_region
      _
    $region21: #{_triplet_forward.1} parent=1 // pred_fallthru
      _
    // Predicated region
    $region22: #{_triplet_forward.1} parent=1 // pred_check
      _
    $region23: #{_triplet_forward.1} parent=1 // pred_check_branch
      %38 = sbr.rel (0) target = $region25
    $region24: #{_triplet_forward.1} parent=1 // pred_region
      %40 = vsyncadd [#allocation3], 0
      %s41 = sshll.u32 %s5, 4
      %s42 = int_to_ptr.hbm [resolvable:$true] %s41
      %s43 = sshll.u32 [#allocation2], 4
      %s44 = int_to_ptr.vmem [resolvable:$true] %s43
      %49 = dma.hbm_to_vmem [thread:$0]  %s42, 4096, %s44, [#allocation3], 128, 128, 8
    $region25: #{_triplet_forward.1} parent=1 // pred_fallthru
      _
    // Predicated region
    $region26: #{_triplet_forward.1} parent=1 // pred_check
      _
    $region27: #{_triplet_forward.1} parent=1 // pred_check_branch
      %51 = sbr.rel (0) target = $region29
    $region28: #{_triplet_forward.1} parent=1 // pred_region
      _
    $region29: #{_triplet_forward.1} parent=1 // pred_fallthru
      _
    // Predicated region
    $region30: #{_triplet_forward.1} parent=1 // pred_check
      _
    $region31: #{_triplet_forward.1} parent=1 // pred_check_branch
      %53 = sbr.rel (0) target = $region33
    $region32: #{_triplet_forward.1} parent=1 // pred_region
      %55 = vsyncadd [#allocation5], 0
      %s56 = sshll.u32 %s7, 4
      %s57 = int_to_ptr.hbm [resolvable:$true] %s56
      %s58 = sshll.u32 [#allocation4], 4
      %s59 = int_to_ptr.vmem [resolvable:$true] %s58
      %64 = dma.hbm_to_vmem [thread:$0]  %s57, 2048, %s59, [#allocation5], 64, 64, 4
    $region33: #{_triplet_forward.1} parent=1 // pred_fallthru
      _
    // Predicated region
    $region34: #{_triplet_forward.1} parent=1 // pred_check
      _
    $region35: #{_triplet_forward.1} parent=1 // pred_check_branch
      %66 = sbr.rel (0) target = $region37
    $region36: #{_triplet_forward.1} parent=1 // pred_region
      %68 = vsyncadd [#allocation5], 0
      %s70 = sshll.u32 %s8, 4
      %s71 = int_to_ptr.hbm [resolvable:$true] %s70
      %s72 = sshll.u32 [#allocation6], 4
      %s73 = int_to_ptr.vmem [resolvable:$true] %s72
      %75 = dma.hbm_to_vmem [thread:$0]  %s71, 16, %s73, [#allocation5]
    $region37: #{_triplet_forward.1} parent=1 // pred_fallthru
      _
    // Predicated region
    $region38: #{_triplet_forward.1} parent=1 // pred_check
      _
    $region39: #{_triplet_forward.1} parent=1 // pred_check_branch
      %77 = sbr.rel (0) target = $region41
    $region40: #{_triplet_forward.1} parent=1 // pred_region
      %79 = vsyncadd [#allocation8], 0
      %s80 = sshll.u32 %s9, 4
      %s81 = int_to_ptr.hbm [resolvable:$true] %s80
      %s82 = sshll.u32 [#allocation7], 4
      %s83 = int_to_ptr.vmem [resolvable:$true] %s82
      %88 = dma.hbm_to_vmem [thread:$0]  %s81, 768, %s83, [#allocation8], 128, 128, 8
    $region41: #{_triplet_forward.1} parent=1 // pred_fallthru
      _
    // Predicated region
    $region42: #{_triplet_forward.1} parent=1 // pred_check
      _
    $region43: #{_triplet_forward.1} parent=1 // pred_check_branch
      %90 = sbr.rel (0) target = $region45
    $region44: #{_triplet_forward.1} parent=1 // pred_region
      _
    $region45: #{_triplet_forward.1} parent=1 // pred_fallthru
      _
    // Predicated region
    $region46: #{_triplet_forward.1} parent=1 // pred_check
      _
    $region47: #{_triplet_forward.1} parent=1 // pred_check_branch
      %92 = sbr.rel (0) target = $region49
    $region48: #{_triplet_forward.1} parent=1 // pred_region
      %94 = vsyncadd [#allocation8], 0
      %s95 = sshll.u32 %s11, 4
      %s96 = int_to_ptr.hbm [resolvable:$true] %s95
      %s97 = sshll.u32 [#allocation9], 4
      %s98 = int_to_ptr.vmem [resolvable:$true] %s97
      %103 = dma.hbm_to_vmem [thread:$0]  %s96, 4096, %s98, [#allocation8], 128, 128, 8
    $region49: #{_triplet_forward.1} parent=1 // pred_fallthru
      _
    // Predicated region
    $region50: #{_triplet_forward.1} parent=1 // pred_check
      _
    $region51: #{_triplet_forward.1} parent=1 // pred_check_branch
      %105 = sbr.rel (0) target = $region53
    $region52: #{_triplet_forward.1} parent=1 // pred_region
      _
    $region53: #{_triplet_forward.1} parent=1 // pred_fallthru
      _
    // Predicated region
    $region54: #{_triplet_forward.1} parent=1 // pred_check
      _
    $region55: #{_triplet_forward.1} parent=1 // pred_check_branch
      %107 = sbr.rel (0) target = $region57
    $region56: #{_triplet_forward.1} parent=1 // pred_region
      %109 = vsyncadd [#allocation11], 0
      %s110 = sshll.u32 %s13, 4
      %s111 = int_to_ptr.hbm [resolvable:$true] %s110
      %s112 = sshll.u32 [#allocation10], 4
      %s113 = int_to_ptr.vmem [resolvable:$true] %s112
      %118 = dma.hbm_to_vmem [thread:$0]  %s111, 2048, %s113, [#allocation11], 64, 64, 4
    $region57: #{_triplet_forward.1} parent=1 // pred_fallthru
      _
    // Predicated region
    $region58: #{_triplet_forward.1} parent=1 // pred_check
      _
    $region59: #{_triplet_forward.1} parent=1 // pred_check_branch
      %120 = sbr.rel (0) target = $region61
    $region60: #{_triplet_forward.1} parent=1 // pred_region
      _
    $region61: #{_triplet_forward.1} parent=1 // pred_fallthru
      _
    // Predicated region
    $region62: #{_triplet_forward.1} parent=1 // pred_check
      _
    $region63: #{_triplet_forward.1} parent=1 // pred_check_branch
      %122 = sbr.rel (0) target = $region65
    $region64: #{_triplet_forward.1} parent=1 // pred_region
      %124 = dma.done [#allocation3], 4096
    $region65: #{_triplet_forward.1} parent=1 // pred_fallthru
      _
    // Predicated region
    $region66: #{_triplet_forward.1} parent=1 // pred_check
      _
    $region67: #{_triplet_forward.1} parent=1 // pred_check_branch
      %126 = sbr.rel (0) target = $region69
    $region68: #{_triplet_forward.1} parent=1 // pred_region
      %128 = dma.done [#allocation5], 2048
    $region69: #{_triplet_forward.1} parent=1 // pred_fallthru
      _
    // Predicated region
    $region70: #{_triplet_forward.1} parent=1 // pred_check
      _
    $region71: #{_triplet_forward.1} parent=1 // pred_check_branch
      %130 = sbr.rel (0) target = $region73
    $region72: #{_triplet_forward.1} parent=1 // pred_region
      %132 = dma.done [#allocation5], 16
    $region73: #{_triplet_forward.1} parent=1 // pred_fallthru
      _
    // Predicated region
    $region74: #{_triplet_forward.1} parent=1 // pred_check
      _
    $region75: #{_triplet_forward.1} parent=1 // pred_check_branch
      %134 = sbr.rel (0) target = $region77
    $region76: #{_triplet_forward.1} parent=1 // pred_region
      %136 = dma.done [#allocation8], 768
    $region77: #{_triplet_forward.1} parent=1 // pred_fallthru
      _
    // Predicated region
    $region78: #{_triplet_forward.1} parent=1 // pred_check
      _
    $region79: #{_triplet_forward.1} parent=1 // pred_check_branch
      %138 = sbr.rel (0) target = $region81
    $region80: #{_triplet_forward.1} parent=1 // pred_region
      %140 = dma.done [#allocation8], 4096
    $region81: #{_triplet_forward.1} parent=1 // pred_fallthru
      _
    // Predicated region
    $region82: #{_triplet_forward.1} parent=1 // pred_check
      _
    $region83: #{_triplet_forward.1} parent=1 // pred_check_branch
      %142 = sbr.rel (0) target = $region85
    $region84: #{_triplet_forward.1} parent=1 // pred_region
      %144 = dma.done [#allocation11], 2048
    $region85: #{_triplet_forward.1} parent=1 // pred_fallthru
      _
    %v146 = vld [vmem:[%s0] sm:$0xff]
    %v147 = vpack.c.bf16 %v146, %v146
    %v148 = vld [vmem:[%s3] sm:$0xff]
    %v149 = vld [vmem:[%s3 + $0x8] sm:$0xff]
    %v150 = vld [vmem:[%s3 + $0x10] sm:$0xff]
    %v151 = vld [vmem:[%s3 + $0x18] sm:$0xff]
    %v152 = vld [vmem:[%s4] sm:$0x3]
    %v154 = vperm.slane %v152, 0
    %v155 = vperm.slane %v152, 1
    %v162 = vunpack.c.l.b16 %v148
    %v163 = vunpack.c.h.b16 %v148
    %v164 = vunpack.c.l.b16 %v149
    %v165 = vunpack.c.h.b16 %v149
    %v166 = vunpack.c.l.b16 %v150
    %v167 = vunpack.c.h.b16 %v150
    %v168 = vunpack.c.l.b16 %v151
    %v169 = vunpack.c.h.b16 %v151
    %v170 = vpack.c.b16 %v164, %v162
    %v171 = vpack.c.b16 %v165, %v163
    %v172 = vpack.c.b16 %v168, %v166
    %v173 = vpack.c.b16 %v169, %v167
    %vm178 = vcmask 261120
    %v180 = vsel %vm178, %v147, 0
    %182 = vmatpush.bf16.msra.mxu0 0
    %183 = vmatpush.bf16.msra.mxu0 0
    %184 = vmatpush.bf16.msra.mxu0 0
    %185 = vmatpush.bf16.msra.mxu0 0
    %186 = vmatpush.bf16.msra.mxu0 0
    %187 = vmatpush.bf16.msra.mxu0 0
    %188 = vmatpush.bf16.msra.mxu0 %v172
    %189 = vmatpush.bf16.msra.mxu0 %v170
    %190 = vmatmul.bf16.gmra.mxu0 %v180
    %v191 = vpop.f32.mrf.mxu0
    %v192 = vadd.f32 %v154, %v191
    %v193 = vpop.f32.mrf.mxu0
    %194 = vdwg.mxu0
    %195 = vmatpush.bf16.msra.mxu0 0
    %196 = vmatpush.bf16.msra.mxu0 0
    %197 = vmatpush.bf16.msra.mxu0 0
    %198 = vmatpush.bf16.msra.mxu0 0
    %199 = vmatpush.bf16.msra.mxu0 0
    %200 = vmatpush.bf16.msra.mxu0 0
    %201 = vmatpush.bf16.msra.mxu0 %v173
    %202 = vmatpush.bf16.msra.mxu0 %v171
    %203 = vmatmul.bf16.gmra.mxu0 %v180
    %v204 = vpop.f32.mrf.mxu0
    %v205 = vadd.f32 %v155, %v204
    %v206 = vpop.f32.mrf.mxu0
    %207 = vdwg.mxu0
    %v208 = vsub.f32 0.0, %v192
    %v209 = vsub.f32 0.0, %v205
    %v210 = vmul.f32 %v208, 1.442695
    %v211 = vpow.pop %v210
    %v212 = vmul.f32 %v209, 1.442695
    %v213 = vpow.pop %v212
    %v214 = vadd.f32 %v211, 1.0
    %v215 = vadd.f32 %v213, 1.0
    %v216 = vrcp.pop %v214
    %v217 = vrcp.pop %v215
    %v218 = vpack.c.bf16 %v216, %v216
    %v219 = vpack.c.bf16 %v217, %v217
    %v220 = vld [vmem:[#allocation2] sm:$0xff]
    %v221 = vld [vmem:[#allocation2 + $0x8] sm:$0xff]
    %v222 = vld [vmem:[#allocation2 + $0x10] sm:$0xff]
    %v223 = vld [vmem:[#allocation2 + $0x18] sm:$0xff]
    %v224 = vld [vmem:[#allocation2 + $0x20] sm:$0xff]
    %v225 = vld [vmem:[#allocation2 + $0x28] sm:$0xff]
    %v226 = vld [vmem:[#allocation2 + $0x30] sm:$0xff]
    %v227 = vld [vmem:[#allocation2 + $0x38] sm:$0xff]
    %v228 = vld [vmem:[#allocation2 + $0x40] sm:$0xff]
    %v229 = vld [vmem:[#allocation2 + $0x48] sm:$0xff]
    %v230 = vld [vmem:[#allocation2 + $0x50] sm:$0xff]
    %v231 = vld [vmem:[#allocation2 + $0x58] sm:$0xff]
    %v232 = vld [vmem:[#allocation2 + $0x60] sm:$0xff]
    %v233 = vld [vmem:[#allocation2 + $0x68] sm:$0xff]
    %v234 = vld [vmem:[#allocation2 + $0x70] sm:$0xff]
    %v235 = vld [vmem:[#allocation2 + $0x78] sm:$0xff]
    %v236 = vld [vmem:[#allocation2 + $0x80] sm:$0xff]
    %v237 = vld [vmem:[#allocation2 + $0x88] sm:$0xff]
    %v238 = vld [vmem:[#allocation2 + $0x90] sm:$0xff]
    %v239 = vld [vmem:[#allocation2 + $0x98] sm:$0xff]
    %v240 = vld [vmem:[#allocation2 + $0xa0] sm:$0xff]
    %v241 = vld [vmem:[#allocation2 + $0xa8] sm:$0xff]
    %v242 = vld [vmem:[#allocation2 + $0xb0] sm:$0xff]
    %v243 = vld [vmem:[#allocation2 + $0xb8] sm:$0xff]
    %v244 = vld [vmem:[#allocation2 + $0xc0] sm:$0xff]
    %v245 = vld [vmem:[#allocation2 + $0xc8] sm:$0xff]
    %v246 = vld [vmem:[#allocation2 + $0xd0] sm:$0xff]
    %v247 = vld [vmem:[#allocation2 + $0xd8] sm:$0xff]
    %v248 = vld [vmem:[#allocation2 + $0xe0] sm:$0xff]
    %v249 = vld [vmem:[#allocation2 + $0xe8] sm:$0xff]
    %v250 = vld [vmem:[#allocation2 + $0xf0] sm:$0xff]
    %v251 = vld [vmem:[#allocation2 + $0xf8] sm:$0xff]
    %v252 = vld [vmem:[%s6] sm:$0x3]
    %v254 = vperm.slane %v252, 0
    %v255 = vperm.slane %v252, 1
    %v290 = vunpack.c.l.b16 %v220
    %v291 = vunpack.c.h.b16 %v220
    %v292 = vunpack.c.l.b16 %v221
    %v293 = vunpack.c.h.b16 %v221
    %v294 = vunpack.c.l.b16 %v222
    %v295 = vunpack.c.h.b16 %v222
    %v296 = vunpack.c.l.b16 %v223
    %v297 = vunpack.c.h.b16 %v223
    %v298 = vunpack.c.l.b16 %v224
    %v299 = vunpack.c.h.b16 %v224
    %v300 = vunpack.c.l.b16 %v225
    %v301 = vunpack.c.h.b16 %v225
    %v302 = vunpack.c.l.b16 %v226
    %v303 = vunpack.c.h.b16 %v226
    %v304 = vunpack.c.l.b16 %v227
    %v305 = vunpack.c.h.b16 %v227
    %v306 = vunpack.c.l.b16 %v228
    %v307 = vunpack.c.h.b16 %v228
    %v308 = vunpack.c.l.b16 %v229
    %v309 = vunpack.c.h.b16 %v229
    %v310 = vunpack.c.l.b16 %v230
    %v311 = vunpack.c.h.b16 %v230
    %v312 = vunpack.c.l.b16 %v231
    %v313 = vunpack.c.h.b16 %v231
    %v314 = vunpack.c.l.b16 %v232
    %v315 = vunpack.c.h.b16 %v232
    %v316 = vunpack.c.l.b16 %v233
    %v317 = vunpack.c.h.b16 %v233
    %v318 = vunpack.c.l.b16 %v234
    %v319 = vunpack.c.h.b16 %v234
    %v320 = vunpack.c.l.b16 %v235
    %v321 = vunpack.c.h.b16 %v235
    %v322 = vunpack.c.l.b16 %v236
    %v323 = vunpack.c.h.b16 %v236
    %v324 = vunpack.c.l.b16 %v237
    %v325 = vunpack.c.h.b16 %v237
    %v326 = vunpack.c.l.b16 %v238
    %v327 = vunpack.c.h.b16 %v238
    %v328 = vunpack.c.l.b16 %v239
    %v329 = vunpack.c.h.b16 %v239
    %v330 = vunpack.c.l.b16 %v240
    %v331 = vunpack.c.h.b16 %v240
    %v332 = vunpack.c.l.b16 %v241
    %v333 = vunpack.c.h.b16 %v241
    %v334 = vunpack.c.l.b16 %v242
    %v335 = vunpack.c.h.b16 %v242
    %v336 = vunpack.c.l.b16 %v243
    %v337 = vunpack.c.h.b16 %v243
    %v338 = vunpack.c.l.b16 %v244
    %v339 = vunpack.c.h.b16 %v244
    %v340 = vunpack.c.l.b16 %v245
    %v341 = vunpack.c.h.b16 %v245
    %v342 = vunpack.c.l.b16 %v246
    %v343 = vunpack.c.h.b16 %v246
    %v344 = vunpack.c.l.b16 %v247
    %v345 = vunpack.c.h.b16 %v247
    %v346 = vunpack.c.l.b16 %v248
    %v347 = vunpack.c.h.b16 %v248
    %v348 = vunpack.c.l.b16 %v249
    %v349 = vunpack.c.h.b16 %v249
    %v350 = vunpack.c.l.b16 %v250
    %v351 = vunpack.c.h.b16 %v250
    %v352 = vunpack.c.l.b16 %v251
    %v353 = vunpack.c.h.b16 %v251
    %v354 = vpack.c.b16 %v292, %v290
    %v355 = vpack.c.b16 %v293, %v291
    %v356 = vpack.c.b16 %v296, %v294
    %v357 = vpack.c.b16 %v297, %v295
    %v358 = vpack.c.b16 %v300, %v298
    %v359 = vpack.c.b16 %v301, %v299
    %v360 = vpack.c.b16 %v304, %v302
    %v361 = vpack.c.b16 %v305, %v303
    %v362 = vpack.c.b16 %v308, %v306
    %v363 = vpack.c.b16 %v309, %v307
    %v364 = vpack.c.b16 %v312, %v310
    %v365 = vpack.c.b16 %v313, %v311
    %v366 = vpack.c.b16 %v316, %v314
    %v367 = vpack.c.b16 %v317, %v315
    %v368 = vpack.c.b16 %v320, %v318
    %v369 = vpack.c.b16 %v321, %v319
    %v370 = vpack.c.b16 %v324, %v322
    %v371 = vpack.c.b16 %v325, %v323
    %v372 = vpack.c.b16 %v328, %v326
    %v373 = vpack.c.b16 %v329, %v327
    %v374 = vpack.c.b16 %v332, %v330
    %v375 = vpack.c.b16 %v333, %v331
    %v376 = vpack.c.b16 %v336, %v334
    %v377 = vpack.c.b16 %v337, %v335
    %v378 = vpack.c.b16 %v340, %v338
    %v379 = vpack.c.b16 %v341, %v339
    %v380 = vpack.c.b16 %v344, %v342
    %v381 = vpack.c.b16 %v345, %v343
    %v382 = vpack.c.b16 %v348, %v346
    %v383 = vpack.c.b16 %v349, %v347
    %v384 = vpack.c.b16 %v352, %v350
    %v385 = vpack.c.b16 %v353, %v351
    %418 = vmatpush.bf16.msra.mxu0 %v368
    %419 = vmatpush.bf16.msra.mxu0 %v366
    %420 = vmatpush.bf16.msra.mxu0 %v364
    %421 = vmatpush.bf16.msra.mxu0 %v362
    %422 = vmatpush.bf16.msra.mxu0 %v360
    %423 = vmatpush.bf16.msra.mxu0 %v358
    %424 = vmatpush.bf16.msra.mxu0 %v356
    %425 = vmatpush.bf16.msra.mxu0 %v354
    %426 = vmatmul.bf16.gmra.mxu0 %v218
    %v427 = vpop.f32.mrf.mxu0
    %v428 = vadd.f32 %v254, %v427
    %v429 = vpop.f32.mrf.mxu0
    %430 = vdwg.mxu0
    %431 = vmatpush.bf16.msra.mxu0 %v384
    %432 = vmatpush.bf16.msra.mxu0 %v382
    %433 = vmatpush.bf16.msra.mxu0 %v380
    %434 = vmatpush.bf16.msra.mxu0 %v378
    %435 = vmatpush.bf16.msra.mxu0 %v376
    %436 = vmatpush.bf16.msra.mxu0 %v374
    %437 = vmatpush.bf16.msra.mxu0 %v372
    %438 = vmatpush.bf16.msra.mxu0 %v370
    %439 = vmatmul.bf16.gmra.mxu0 %v219
    %v440 = vpop.f32.mrf.mxu0
    %v441 = vadd.f32 %v428, %v440
    %v442 = vpop.f32.mrf.mxu0
    %443 = vdwg.mxu0
    %444 = vmatpush.bf16.msra.mxu0 %v369
    %445 = vmatpush.bf16.msra.mxu0 %v367
    %446 = vmatpush.bf16.msra.mxu0 %v365
    %447 = vmatpush.bf16.msra.mxu0 %v363
    %448 = vmatpush.bf16.msra.mxu0 %v361
    %449 = vmatpush.bf16.msra.mxu0 %v359
    %450 = vmatpush.bf16.msra.mxu0 %v357
    %451 = vmatpush.bf16.msra.mxu0 %v355
    %452 = vmatmul.bf16.gmra.mxu0 %v218
    %v453 = vpop.f32.mrf.mxu0
    %v454 = vadd.f32 %v255, %v453
    %v455 = vpop.f32.mrf.mxu0
    %456 = vdwg.mxu0
    %457 = vmatpush.bf16.msra.mxu0 %v385
    %458 = vmatpush.bf16.msra.mxu0 %v383
    %459 = vmatpush.bf16.msra.mxu0 %v381
    %460 = vmatpush.bf16.msra.mxu0 %v379
    %461 = vmatpush.bf16.msra.mxu0 %v377
    %462 = vmatpush.bf16.msra.mxu0 %v375
    %463 = vmatpush.bf16.msra.mxu0 %v373
    %464 = vmatpush.bf16.msra.mxu0 %v371
    %465 = vmatmul.bf16.gmra.mxu0 %v219
    %v466 = vpop.f32.mrf.mxu0
    %v467 = vadd.f32 %v454, %v466
    %v468 = vpop.f32.mrf.mxu0
    %469 = vdwg.mxu0
    %v470 = vsub.f32 0.0, %v441
    %v471 = vsub.f32 0.0, %v467
    %v472 = vmul.f32 %v470, 1.442695
    %v473 = vpow.pop %v472
    %v474 = vmul.f32 %v471, 1.442695
    %v475 = vpow.pop %v474
    %v476 = vadd.f32 %v473, 1.0
    %v477 = vadd.f32 %v475, 1.0
    %v478 = vrcp.pop %v476
    %v479 = vrcp.pop %v477
    %v480 = vpack.c.bf16 %v478, %v478
    %v481 = vpack.c.bf16 %v479, %v479
    %v482 = vld [vmem:[#allocation4] sm:$0xf]
    %v483 = vld [vmem:[#allocation4 + $0x4] sm:$0xf]
    %v484 = vld [vmem:[#allocation4 + $0x8] sm:$0xf]
    %v485 = vld [vmem:[#allocation4 + $0xc] sm:$0xf]
    %v486 = vld [vmem:[#allocation4 + $0x10] sm:$0xf]
    %v487 = vld [vmem:[#allocation4 + $0x14] sm:$0xf]
    %v488 = vld [vmem:[#allocation4 + $0x18] sm:$0xf]
    %v489 = vld [vmem:[#allocation4 + $0x1c] sm:$0xf]
    %v490 = vld [vmem:[#allocation4 + $0x20] sm:$0xf]
    %v491 = vld [vmem:[#allocation4 + $0x24] sm:$0xf]
    %v492 = vld [vmem:[#allocation4 + $0x28] sm:$0xf]
    %v493 = vld [vmem:[#allocation4 + $0x2c] sm:$0xf]
    %v494 = vld [vmem:[#allocation4 + $0x30] sm:$0xf]
    %v495 = vld [vmem:[#allocation4 + $0x34] sm:$0xf]
    %v496 = vld [vmem:[#allocation4 + $0x38] sm:$0xf]
    %v497 = vld [vmem:[#allocation4 + $0x3c] sm:$0xf]
    %v498 = vld [vmem:[#allocation4 + $0x40] sm:$0xf]
    %v499 = vld [vmem:[#allocation4 + $0x44] sm:$0xf]
    %v500 = vld [vmem:[#allocation4 + $0x48] sm:$0xf]
    %v501 = vld [vmem:[#allocation4 + $0x4c] sm:$0xf]
    %v502 = vld [vmem:[#allocation4 + $0x50] sm:$0xf]
    %v503 = vld [vmem:[#allocation4 + $0x54] sm:$0xf]
    %v504 = vld [vmem:[#allocation4 + $0x58] sm:$0xf]
    %v505 = vld [vmem:[#allocation4 + $0x5c] sm:$0xf]
    %v506 = vld [vmem:[#allocation4 + $0x60] sm:$0xf]
    %v507 = vld [vmem:[#allocation4 + $0x64] sm:$0xf]
    %v508 = vld [vmem:[#allocation4 + $0x68] sm:$0xf]
    %v509 = vld [vmem:[#allocation4 + $0x6c] sm:$0xf]
    %v510 = vld [vmem:[#allocation4 + $0x70] sm:$0xf]
    %v511 = vld [vmem:[#allocation4 + $0x74] sm:$0xf]
    %v512 = vld [vmem:[#allocation4 + $0x78] sm:$0xf]
    %v513 = vld [vmem:[#allocation4 + $0x7c] sm:$0xf]
    %v514 = vld [vmem:[#allocation6] sm:$0x1]
    %v516 = vperm.slane %v514, 0
    %v550 = vunpack.c.l.b16 %v482
    %v551 = vunpack.c.l.b16 %v483
    %v552 = vunpack.c.l.b16 %v484
    %v553 = vunpack.c.l.b16 %v485
    %v554 = vunpack.c.l.b16 %v486
    %v555 = vunpack.c.l.b16 %v487
    %v556 = vunpack.c.l.b16 %v488
    %v557 = vunpack.c.l.b16 %v489
    %v558 = vunpack.c.l.b16 %v490
    %v559 = vunpack.c.l.b16 %v491
    %v560 = vunpack.c.l.b16 %v492
    %v561 = vunpack.c.l.b16 %v493
    %v562 = vunpack.c.l.b16 %v494
    %v563 = vunpack.c.l.b16 %v495
    %v564 = vunpack.c.l.b16 %v496
    %v565 = vunpack.c.l.b16 %v497
    %v566 = vunpack.c.l.b16 %v498
    %v567 = vunpack.c.l.b16 %v499
    %v568 = vunpack.c.l.b16 %v500
    %v569 = vunpack.c.l.b16 %v501
    %v570 = vunpack.c.l.b16 %v502
    %v571 = vunpack.c.l.b16 %v503
    %v572 = vunpack.c.l.b16 %v504
    %v573 = vunpack.c.l.b16 %v505
    %v574 = vunpack.c.l.b16 %v506
    %v575 = vunpack.c.l.b16 %v507
    %v576 = vunpack.c.l.b16 %v508
    %v577 = vunpack.c.l.b16 %v509
    %v578 = vunpack.c.l.b16 %v510
    %v579 = vunpack.c.l.b16 %v511
    %v580 = vunpack.c.l.b16 %v512
    %v581 = vunpack.c.l.b16 %v513
    %v582 = vpack.c.b16 %v551, %v550
    %v583 = vpack.c.b16 %v553, %v552
    %v584 = vpack.c.b16 %v555, %v554
    %v585 = vpack.c.b16 %v557, %v556
    %v586 = vpack.c.b16 %v559, %v558
    %v587 = vpack.c.b16 %v561, %v560
    %v588 = vpack.c.b16 %v563, %v562
    %v589 = vpack.c.b16 %v565, %v564
    %v590 = vpack.c.b16 %v567, %v566
    %v591 = vpack.c.b16 %v569, %v568
    %v592 = vpack.c.b16 %v571, %v570
    %v593 = vpack.c.b16 %v573, %v572
    %v594 = vpack.c.b16 %v575, %v574
    %v595 = vpack.c.b16 %v577, %v576
    %v596 = vpack.c.b16 %v579, %v578
    %v597 = vpack.c.b16 %v581, %v580
    %614 = vmatpush.bf16.msra.mxu0 %v589
    %615 = vmatpush.bf16.msra.mxu0 %v588
    %616 = vmatpush.bf16.msra.mxu0 %v587
    %617 = vmatpush.bf16.msra.mxu0 %v586
    %618 = vmatpush.bf16.msra.mxu0 %v585
    %619 = vmatpush.bf16.msra.mxu0 %v584
    %620 = vmatpush.bf16.msra.mxu0 %v583
    %621 = vmatpush.bf16.msra.mxu0 %v582
    %622 = vmatmul.bf16.gmra.mxu0 %v480
    %v623 = vpop.f32.mrf.mxu0
    %v624 = vadd.f32 %v516, %v623
    %v625 = vpop.f32.mrf.mxu0
    %626 = vdwg.mxu0
    %627 = vmatpush.bf16.msra.mxu0 %v597
    %628 = vmatpush.bf16.msra.mxu0 %v596
    %629 = vmatpush.bf16.msra.mxu0 %v595
    %630 = vmatpush.bf16.msra.mxu0 %v594
    %631 = vmatpush.bf16.msra.mxu0 %v593
    %632 = vmatpush.bf16.msra.mxu0 %v592
    %633 = vmatpush.bf16.msra.mxu0 %v591
    %634 = vmatpush.bf16.msra.mxu0 %v590
    %635 = vmatmul.bf16.gmra.mxu0 %v481
    %v636 = vpop.f32.mrf.mxu0
    %v637 = vadd.f32 %v624, %v636
    %v638 = vpop.f32.mrf.mxu0
    %639 = vdwg.mxu0
    %v640 = vpack.c.bf16 %v637, %v637
    %641 = vst [vmem:[%s15] sm:$0xf] %v640
    %v642 = vld [vmem:[%s1] sm:$0xff]
    %v643 = vpack.c.bf16 %v642, %v642
    %v644 = vld [vmem:[#allocation7] sm:$0xff]
    %v645 = vld [vmem:[#allocation7 + $0x8] sm:$0xff]
    %v646 = vld [vmem:[#allocation7 + $0x10] sm:$0xff]
    %v647 = vld [vmem:[#allocation7 + $0x18] sm:$0xff]
    %v648 = vld [vmem:[#allocation7 + $0x20] sm:$0xff]
    %v649 = vld [vmem:[#allocation7 + $0x28] sm:$0xff]
    %v650 = vld [vmem:[%s10] sm:$0x3]
    %v652 = vperm.slane %v650, 0
    %v653 = vperm.slane %v650, 1
    %v662 = vunpack.c.l.b16 %v644
    %v663 = vunpack.c.h.b16 %v644
    %v664 = vunpack.c.l.b16 %v645
    %v665 = vunpack.c.h.b16 %v645
    %v666 = vunpack.c.l.b16 %v646
    %v667 = vunpack.c.h.b16 %v646
    %v668 = vunpack.c.l.b16 %v647
    %v669 = vunpack.c.h.b16 %v647
    %v670 = vunpack.c.l.b16 %v648
    %v671 = vunpack.c.h.b16 %v648
    %v672 = vunpack.c.l.b16 %v649
    %v673 = vunpack.c.h.b16 %v649
    %v674 = vpack.c.b16 %v664, %v662
    %v675 = vpack.c.b16 %v665, %v663
    %v676 = vpack.c.b16 %v668, %v666
    %v677 = vpack.c.b16 %v669, %v667
    %v678 = vpack.c.b16 %v672, %v670
    %v679 = vpack.c.b16 %v673, %v671
    %vm686 = vcmask 392192
    %v688 = vsel %vm686, %v643, 0
    %690 = vmatpush.bf16.msra.mxu0 0
    %691 = vmatpush.bf16.msra.mxu0 0
    %692 = vmatpush.bf16.msra.mxu0 0
    %693 = vmatpush.bf16.msra.mxu0 0
    %694 = vmatpush.bf16.msra.mxu0 0
    %695 = vmatpush.bf16.msra.mxu0 %v678
    %696 = vmatpush.bf16.msra.mxu0 %v676
    %697 = vmatpush.bf16.msra.mxu0 %v674
    %698 = vmatmul.bf16.gmra.mxu0 %v688
    %v699 = vpop.f32.mrf.mxu0
    %v700 = vadd.f32 %v652, %v699
    %v701 = vpop.f32.mrf.mxu0
    %702 = vdwg.mxu0
    %703 = vmatpush.bf16.msra.mxu0 0
    %704 = vmatpush.bf16.msra.mxu0 0
    %705 = vmatpush.bf16.msra.mxu0 0
    %706 = vmatpush.bf16.msra.mxu0 0
    %707 = vmatpush.bf16.msra.mxu0 0
    %708 = vmatpush.bf16.msra.mxu0 %v679
    %709 = vmatpush.bf16.msra.mxu0 %v677
    %710 = vmatpush.bf16.msra.mxu0 %v675
    %711 = vmatmul.bf16.gmra.mxu0 %v688
    %v712 = vpop.f32.mrf.mxu0
    %v713 = vadd.f32 %v653, %v712
    %v714 = vpop.f32.mrf.mxu0
    %715 = vdwg.mxu0
    %v716 = vsub.f32 0.0, %v700
    %v717 = vsub.f32 0.0, %v713
    %v718 = vmul.f32 %v716, 1.442695
    %v719 = vpow.pop %v718
    %v720 = vmul.f32 %v717, 1.442695
    %v721 = vpow.pop %v720
    %v722 = vadd.f32 %v719, 1.0
    %v723 = vadd.f32 %v721, 1.0
    %v724 = vrcp.pop %v722
    %v725 = vrcp.pop %v723
    %v726 = vpack.c.bf16 %v724, %v724
    %v727 = vpack.c.bf16 %v725, %v725
    %v728 = vld [vmem:[#allocation9] sm:$0xff]
    %v729 = vld [vmem:[#allocation9 + $0x8] sm:$0xff]
    %v730 = vld [vmem:[#allocation9 + $0x10] sm:$0xff]
    %v731 = vld [vmem:[#allocation9 + $0x18] sm:$0xff]
    %v732 = vld [vmem:[#allocation9 + $0x20] sm:$0xff]
    %v733 = vld [vmem:[#allocation9 + $0x28] sm:$0xff]
    %v734 = vld [vmem:[#allocation9 + $0x30] sm:$0xff]
    %v735 = vld [vmem:[#allocation9 + $0x38] sm:$0xff]
    %v736 = vld [vmem:[#allocation9 + $0x40] sm:$0xff]
    %v737 = vld [vmem:[#allocation9 + $0x48] sm:$0xff]
    %v738 = vld [vmem:[#allocation9 + $0x50] sm:$0xff]
    %v739 = vld [vmem:[#allocation9 + $0x58] sm:$0xff]
    %v740 = vld [vmem:[#allocation9 + $0x60] sm:$0xff]
    %v741 = vld [vmem:[#allocation9 + $0x68] sm:$0xff]
    %v742 = vld [vmem:[#allocation9 + $0x70] sm:$0xff]
    %v743 = vld [vmem:[#allocation9 + $0x78] sm:$0xff]
    %v744 = vld [vmem:[#allocation9 + $0x80] sm:$0xff]
    %v745 = vld [vmem:[#allocation9 + $0x88] sm:$0xff]
    %v746 = vld [vmem:[#allocation9 + $0x90] sm:$0xff]
    %v747 = vld [vmem:[#allocation9 + $0x98] sm:$0xff]
    %v748 = vld [vmem:[#allocation9 + $0xa0] sm:$0xff]
    %v749 = vld [vmem:[#allocation9 + $0xa8] sm:$0xff]
    %v750 = vld [vmem:[#allocation9 + $0xb0] sm:$0xff]
    %v751 = vld [vmem:[#allocation9 + $0xb8] sm:$0xff]
    %v752 = vld [vmem:[#allocation9 + $0xc0] sm:$0xff]
    %v753 = vld [vmem:[#allocation9 + $0xc8] sm:$0xff]
    %v754 = vld [vmem:[#allocation9 + $0xd0] sm:$0xff]
    %v755 = vld [vmem:[#allocation9 + $0xd8] sm:$0xff]
    %v756 = vld [vmem:[#allocation9 + $0xe0] sm:$0xff]
    %v757 = vld [vmem:[#allocation9 + $0xe8] sm:$0xff]
    %v758 = vld [vmem:[#allocation9 + $0xf0] sm:$0xff]
    %v759 = vld [vmem:[#allocation9 + $0xf8] sm:$0xff]
    %v760 = vld [vmem:[%s12] sm:$0x3]
    %v762 = vperm.slane %v760, 0
    %v763 = vperm.slane %v760, 1
    %v798 = vunpack.c.l.b16 %v728
    %v799 = vunpack.c.h.b16 %v728
    %v800 = vunpack.c.l.b16 %v729
    %v801 = vunpack.c.h.b16 %v729
    %v802 = vunpack.c.l.b16 %v730
    %v803 = vunpack.c.h.b16 %v730
    %v804 = vunpack.c.l.b16 %v731
    %v805 = vunpack.c.h.b16 %v731
    %v806 = vunpack.c.l.b16 %v732
    %v807 = vunpack.c.h.b16 %v732
    %v808 = vunpack.c.l.b16 %v733
    %v809 = vunpack.c.h.b16 %v733
    %v810 = vunpack.c.l.b16 %v734
    %v811 = vunpack.c.h.b16 %v734
    %v812 = vunpack.c.l.b16 %v735
    %v813 = vunpack.c.h.b16 %v735
    %v814 = vunpack.c.l.b16 %v736
    %v815 = vunpack.c.h.b16 %v736
    %v816 = vunpack.c.l.b16 %v737
    %v817 = vunpack.c.h.b16 %v737
    %v818 = vunpack.c.l.b16 %v738
    %v819 = vunpack.c.h.b16 %v738
    %v820 = vunpack.c.l.b16 %v739
    %v821 = vunpack.c.h.b16 %v739
    %v822 = vunpack.c.l.b16 %v740
    %v823 = vunpack.c.h.b16 %v740
    %v824 = vunpack.c.l.b16 %v741
    %v825 = vunpack.c.h.b16 %v741
    %v826 = vunpack.c.l.b16 %v742
    %v827 = vunpack.c.h.b16 %v742
    %v828 = vunpack.c.l.b16 %v743
    %v829 = vunpack.c.h.b16 %v743
    %v830 = vunpack.c.l.b16 %v744
    %v831 = vunpack.c.h.b16 %v744
    %v832 = vunpack.c.l.b16 %v745
    %v833 = vunpack.c.h.b16 %v745
    %v834 = vunpack.c.l.b16 %v746
    %v835 = vunpack.c.h.b16 %v746
    %v836 = vunpack.c.l.b16 %v747
    %v837 = vunpack.c.h.b16 %v747
    %v838 = vunpack.c.l.b16 %v748
    %v839 = vunpack.c.h.b16 %v748
    %v840 = vunpack.c.l.b16 %v749
    %v841 = vunpack.c.h.b16 %v749
    %v842 = vunpack.c.l.b16 %v750
    %v843 = vunpack.c.h.b16 %v750
    %v844 = vunpack.c.l.b16 %v751
    %v845 = vunpack.c.h.b16 %v751
    %v846 = vunpack.c.l.b16 %v752
    %v847 = vunpack.c.h.b16 %v752
    %v848 = vunpack.c.l.b16 %v753
    %v849 = vunpack.c.h.b16 %v753
    %v850 = vunpack.c.l.b16 %v754
    %v851 = vunpack.c.h.b16 %v754
    %v852 = vunpack.c.l.b16 %v755
    %v853 = vunpack.c.h.b16 %v755
    %v854 = vunpack.c.l.b16 %v756
    %v855 = vunpack.c.h.b16 %v756
    %v856 = vunpack.c.l.b16 %v757
    %v857 = vunpack.c.h.b16 %v757
    %v858 = vunpack.c.l.b16 %v758
    %v859 = vunpack.c.h.b16 %v758
    %v860 = vunpack.c.l.b16 %v759
    %v861 = vunpack.c.h.b16 %v759
    %v862 = vpack.c.b16 %v800, %v798
    %v863 = vpack.c.b16 %v801, %v799
    %v864 = vpack.c.b16 %v804, %v802
    %v865 = vpack.c.b16 %v805, %v803
    %v866 = vpack.c.b16 %v808, %v806
    %v867 = vpack.c.b16 %v809, %v807
    %v868 = vpack.c.b16 %v812, %v810
    %v869 = vpack.c.b16 %v813, %v811
    %v870 = vpack.c.b16 %v816, %v814
    %v871 = vpack.c.b16 %v817, %v815
    %v872 = vpack.c.b16 %v820, %v818
    %v873 = vpack.c.b16 %v821, %v819
    %v874 = vpack.c.b16 %v824, %v822
    %v875 = vpack.c.b16 %v825, %v823
    %v876 = vpack.c.b16 %v828, %v826
    %v877 = vpack.c.b16 %v829, %v827
    %v878 = vpack.c.b16 %v832, %v830
    %v879 = vpack.c.b16 %v833, %v831
    %v880 = vpack.c.b16 %v836, %v834
    %v881 = vpack.c.b16 %v837, %v835
    %v882 = vpack.c.b16 %v840, %v838
    %v883 = vpack.c.b16 %v841, %v839
    %v884 = vpack.c.b16 %v844, %v842
    %v885 = vpack.c.b16 %v845, %v843
    %v886 = vpack.c.b16 %v848, %v846
    %v887 = vpack.c.b16 %v849, %v847
    %v888 = vpack.c.b16 %v852, %v850
    %v889 = vpack.c.b16 %v853, %v851
    %v890 = vpack.c.b16 %v856, %v854
    %v891 = vpack.c.b16 %v857, %v855
    %v892 = vpack.c.b16 %v860, %v858
    %v893 = vpack.c.b16 %v861, %v859
    %926 = vmatpush.bf16.msra.mxu0 %v876
    %927 = vmatpush.bf16.msra.mxu0 %v874
    %928 = vmatpush.bf16.msra.mxu0 %v872
    %929 = vmatpush.bf16.msra.mxu0 %v870
    %930 = vmatpush.bf16.msra.mxu0 %v868
    %931 = vmatpush.bf16.msra.mxu0 %v866
    %932 = vmatpush.bf16.msra.mxu0 %v864
    %933 = vmatpush.bf16.msra.mxu0 %v862
    %934 = vmatmul.bf16.gmra.mxu0 %v726
    %v935 = vpop.f32.mrf.mxu0
    %v936 = vadd.f32 %v762, %v935
    %v937 = vpop.f32.mrf.mxu0
    %938 = vdwg.mxu0
    %939 = vmatpush.bf16.msra.mxu0 %v892
    %940 = vmatpush.bf16.msra.mxu0 %v890
    %941 = vmatpush.bf16.msra.mxu0 %v888
    %942 = vmatpush.bf16.msra.mxu0 %v886
    %943 = vmatpush.bf16.msra.mxu0 %v884
    %944 = vmatpush.bf16.msra.mxu0 %v882
    %945 = vmatpush.bf16.msra.mxu0 %v880
    %946 = vmatpush.bf16.msra.mxu0 %v878
    %947 = vmatmul.bf16.gmra.mxu0 %v727
    %v948 = vpop.f32.mrf.mxu0
    %v949 = vadd.f32 %v936, %v948
    %v950 = vpop.f32.mrf.mxu0
    %951 = vdwg.mxu0
    %952 = vmatpush.bf16.msra.mxu0 %v877
    %953 = vmatpush.bf16.msra.mxu0 %v875
    %954 = vmatpush.bf16.msra.mxu0 %v873
    %955 = vmatpush.bf16.msra.mxu0 %v871
    %956 = vmatpush.bf16.msra.mxu0 %v869
    %957 = vmatpush.bf16.msra.mxu0 %v867
    %958 = vmatpush.bf16.msra.mxu0 %v865
    %959 = vmatpush.bf16.msra.mxu0 %v863
    %960 = vmatmul.bf16.gmra.mxu0 %v726
    %v961 = vpop.f32.mrf.mxu0
    %v962 = vadd.f32 %v763, %v961
    %v963 = vpop.f32.mrf.mxu0
    %964 = vdwg.mxu0
    %965 = vmatpush.bf16.msra.mxu0 %v893
    %966 = vmatpush.bf16.msra.mxu0 %v891
    %967 = vmatpush.bf16.msra.mxu0 %v889
    %968 = vmatpush.bf16.msra.mxu0 %v887
    %969 = vmatpush.bf16.msra.mxu0 %v885
    %970 = vmatpush.bf16.msra.mxu0 %v883
    %971 = vmatpush.bf16.msra.mxu0 %v881
    %972 = vmatpush.bf16.msra.mxu0 %v879
    %973 = vmatmul.bf16.gmra.mxu0 %v727
    %v974 = vpop.f32.mrf.mxu0
    %v975 = vadd.f32 %v962, %v974
    %v976 = vpop.f32.mrf.mxu0
    %977 = vdwg.mxu0
    %v978 = vsub.f32 0.0, %v949
    %v979 = vsub.f32 0.0, %v975
    %v980 = vmul.f32 %v978, 1.442695
    %v981 = vpow.pop %v980
    %v982 = vmul.f32 %v979, 1.442695
    %v983 = vpow.pop %v982
    %v984 = vadd.f32 %v981, 1.0
    %v985 = vadd.f32 %v983, 1.0
    %v986 = vrcp.pop %v984
    %v987 = vrcp.pop %v985
    %v988 = vpack.c.bf16 %v986, %v986
    %v989 = vpack.c.bf16 %v987, %v987
    %v990 = vld [vmem:[#allocation10] sm:$0xf]
    %v991 = vld [vmem:[#allocation10 + $0x4] sm:$0xf]
    %v992 = vld [vmem:[#allocation10 + $0x8] sm:$0xf]
    %v993 = vld [vmem:[#allocation10 + $0xc] sm:$0xf]
    %v994 = vld [vmem:[#allocation10 + $0x10] sm:$0xf]
    %v995 = vld [vmem:[#allocation10 + $0x14] sm:$0xf]
    %v996 = vld [vmem:[#allocation10 + $0x18] sm:$0xf]
    %v997 = vld [vmem:[#allocation10 + $0x1c] sm:$0xf]
    %v998 = vld [vmem:[#allocation10 + $0x20] sm:$0xf]
    %v999 = vld [vmem:[#allocation10 + $0x24] sm:$0xf]
    %v1000 = vld [vmem:[#allocation10 + $0x28] sm:$0xf]
    %v1001 = vld [vmem:[#allocation10 + $0x2c] sm:$0xf]
    %v1002 = vld [vmem:[#allocation10 + $0x30] sm:$0xf]
    %v1003 = vld [vmem:[#allocation10 + $0x34] sm:$0xf]
    %v1004 = vld [vmem:[#allocation10 + $0x38] sm:$0xf]
    %v1005 = vld [vmem:[#allocation10 + $0x3c] sm:$0xf]
    %v1006 = vld [vmem:[#allocation10 + $0x40] sm:$0xf]
    %v1007 = vld [vmem:[#allocation10 + $0x44] sm:$0xf]
    %v1008 = vld [vmem:[#allocation10 + $0x48] sm:$0xf]
    %v1009 = vld [vmem:[#allocation10 + $0x4c] sm:$0xf]
    %v1010 = vld [vmem:[#allocation10 + $0x50] sm:$0xf]
    %v1011 = vld [vmem:[#allocation10 + $0x54] sm:$0xf]
    %v1012 = vld [vmem:[#allocation10 + $0x58] sm:$0xf]
    %v1013 = vld [vmem:[#allocation10 + $0x5c] sm:$0xf]
    %v1014 = vld [vmem:[#allocation10 + $0x60] sm:$0xf]
    %v1015 = vld [vmem:[#allocation10 + $0x64] sm:$0xf]
    %v1016 = vld [vmem:[#allocation10 + $0x68] sm:$0xf]
    %v1017 = vld [vmem:[#allocation10 + $0x6c] sm:$0xf]
    %v1018 = vld [vmem:[#allocation10 + $0x70] sm:$0xf]
    %v1019 = vld [vmem:[#allocation10 + $0x74] sm:$0xf]
    %v1020 = vld [vmem:[#allocation10 + $0x78] sm:$0xf]
    %v1021 = vld [vmem:[#allocation10 + $0x7c] sm:$0xf]
    %v1022 = vld [vmem:[%s14] sm:$0x1]
    %v1024 = vperm.slane %v1022, 0
    %v1058 = vunpack.c.l.b16 %v990
    %v1059 = vunpack.c.l.b16 %v991
    %v1060 = vunpack.c.l.b16 %v992
    %v1061 = vunpack.c.l.b16 %v993
    %v1062 = vunpack.c.l.b16 %v994
    %v1063 = vunpack.c.l.b16 %v995
    %v1064 = vunpack.c.l.b16 %v996
    %v1065 = vunpack.c.l.b16 %v997
    %v1066 = vunpack.c.l.b16 %v998
    %v1067 = vunpack.c.l.b16 %v999
    %v1068 = vunpack.c.l.b16 %v1000
    %v1069 = vunpack.c.l.b16 %v1001
    %v1070 = vunpack.c.l.b16 %v1002
    %v1071 = vunpack.c.l.b16 %v1003
    %v1072 = vunpack.c.l.b16 %v1004
    %v1073 = vunpack.c.l.b16 %v1005
    %v1074 = vunpack.c.l.b16 %v1006
    %v1075 = vunpack.c.l.b16 %v1007
    %v1076 = vunpack.c.l.b16 %v1008
    %v1077 = vunpack.c.l.b16 %v1009
    %v1078 = vunpack.c.l.b16 %v1010
    %v1079 = vunpack.c.l.b16 %v1011
    %v1080 = vunpack.c.l.b16 %v1012
    %v1081 = vunpack.c.l.b16 %v1013
    %v1082 = vunpack.c.l.b16 %v1014
    %v1083 = vunpack.c.l.b16 %v1015
    %v1084 = vunpack.c.l.b16 %v1016
    %v1085 = vunpack.c.l.b16 %v1017
    %v1086 = vunpack.c.l.b16 %v1018
    %v1087 = vunpack.c.l.b16 %v1019
    %v1088 = vunpack.c.l.b16 %v1020
    %v1089 = vunpack.c.l.b16 %v1021
    %v1090 = vpack.c.b16 %v1059, %v1058
    %v1091 = vpack.c.b16 %v1061, %v1060
    %v1092 = vpack.c.b16 %v1063, %v1062
    %v1093 = vpack.c.b16 %v1065, %v1064
    %v1094 = vpack.c.b16 %v1067, %v1066
    %v1095 = vpack.c.b16 %v1069, %v1068
    %v1096 = vpack.c.b16 %v1071, %v1070
    %v1097 = vpack.c.b16 %v1073, %v1072
    %v1098 = vpack.c.b16 %v1075, %v1074
    %v1099 = vpack.c.b16 %v1077, %v1076
    %v1100 = vpack.c.b16 %v1079, %v1078
    %v1101 = vpack.c.b16 %v1081, %v1080
    %v1102 = vpack.c.b16 %v1083, %v1082
    %v1103 = vpack.c.b16 %v1085, %v1084
    %v1104 = vpack.c.b16 %v1087, %v1086
    %v1105 = vpack.c.b16 %v1089, %v1088
    %1122 = vmatpush.bf16.msra.mxu0 %v1097
    %1123 = vmatpush.bf16.msra.mxu0 %v1096
    %1124 = vmatpush.bf16.msra.mxu0 %v1095
    %1125 = vmatpush.bf16.msra.mxu0 %v1094
    %1126 = vmatpush.bf16.msra.mxu0 %v1093
    %1127 = vmatpush.bf16.msra.mxu0 %v1092
    %1128 = vmatpush.bf16.msra.mxu0 %v1091
    %1129 = vmatpush.bf16.msra.mxu0 %v1090
    %1130 = vmatmul.bf16.gmra.mxu0 %v988
    %v1131 = vpop.f32.mrf.mxu0
    %v1132 = vadd.f32 %v1024, %v1131
    %v1133 = vpop.f32.mrf.mxu0
    %1134 = vdwg.mxu0
    %1135 = vmatpush.bf16.msra.mxu0 %v1105
    %1136 = vmatpush.bf16.msra.mxu0 %v1104
    %1137 = vmatpush.bf16.msra.mxu0 %v1103
    %1138 = vmatpush.bf16.msra.mxu0 %v1102
    %1139 = vmatpush.bf16.msra.mxu0 %v1101
    %1140 = vmatpush.bf16.msra.mxu0 %v1100
    %1141 = vmatpush.bf16.msra.mxu0 %v1099
    %1142 = vmatpush.bf16.msra.mxu0 %v1098
    %1143 = vmatmul.bf16.gmra.mxu0 %v989
    %v1144 = vpop.f32.mrf.mxu0
    %v1145 = vadd.f32 %v1132, %v1144
    %v1146 = vpop.f32.mrf.mxu0
    %1147 = vdwg.mxu0
    %v1148 = vpack.c.bf16 %v1145, %v1145
    %1149 = vst [vmem:[%s16] sm:$0xf] %v1148
    %v1150 = vld [vmem:[%s2] sm:$0xff]
    %v1151 = vpack.c.bf16 %v1150, %v1150
    %v1152 = vld [vmem:[#allocation7] sm:$0xff]
    %v1153 = vld [vmem:[#allocation7 + $0x8] sm:$0xff]
    %v1154 = vld [vmem:[#allocation7 + $0x10] sm:$0xff]
    %v1155 = vld [vmem:[#allocation7 + $0x18] sm:$0xff]
    %v1156 = vld [vmem:[#allocation7 + $0x20] sm:$0xff]
    %v1157 = vld [vmem:[#allocation7 + $0x28] sm:$0xff]
    %v1158 = vld [vmem:[%s10] sm:$0x3]
    %v1160 = vperm.slane %v1158, 0
    %v1161 = vperm.slane %v1158, 1
    %v1170 = vunpack.c.l.b16 %v1152
    %v1171 = vunpack.c.h.b16 %v1152
    %v1172 = vunpack.c.l.b16 %v1153
    %v1173 = vunpack.c.h.b16 %v1153
    %v1174 = vunpack.c.l.b16 %v1154
    %v1175 = vunpack.c.h.b16 %v1154
    %v1176 = vunpack.c.l.b16 %v1155
    %v1177 = vunpack.c.h.b16 %v1155
    %v1178 = vunpack.c.l.b16 %v1156
    %v1179 = vunpack.c.h.b16 %v1156
    %v1180 = vunpack.c.l.b16 %v1157
    %v1181 = vunpack.c.h.b16 %v1157
    %v1182 = vpack.c.b16 %v1172, %v1170
    %v1183 = vpack.c.b16 %v1173, %v1171
    %v1184 = vpack.c.b16 %v1176, %v1174
    %v1185 = vpack.c.b16 %v1177, %v1175
    %v1186 = vpack.c.b16 %v1180, %v1178
    %v1187 = vpack.c.b16 %v1181, %v1179
    %v1195 = vsel %vm686, %v1151, 0
    %1197 = vmatpush.bf16.msra.mxu0 0
    %1198 = vmatpush.bf16.msra.mxu0 0
    %1199 = vmatpush.bf16.msra.mxu0 0
    %1200 = vmatpush.bf16.msra.mxu0 0
    %1201 = vmatpush.bf16.msra.mxu0 0
    %1202 = vmatpush.bf16.msra.mxu0 %v1186
    %1203 = vmatpush.bf16.msra.mxu0 %v1184
    %1204 = vmatpush.bf16.msra.mxu0 %v1182
    %1205 = vmatmul.bf16.gmra.mxu0 %v1195
    %v1206 = vpop.f32.mrf.mxu0
    %v1207 = vadd.f32 %v1160, %v1206
    %v1208 = vpop.f32.mrf.mxu0
    %1209 = vdwg.mxu0
    %1210 = vmatpush.bf16.msra.mxu0 0
    %1211 = vmatpush.bf16.msra.mxu0 0
    %1212 = vmatpush.bf16.msra.mxu0 0
    %1213 = vmatpush.bf16.msra.mxu0 0
    %1214 = vmatpush.bf16.msra.mxu0 0
    %1215 = vmatpush.bf16.msra.mxu0 %v1187
    %1216 = vmatpush.bf16.msra.mxu0 %v1185
    %1217 = vmatpush.bf16.msra.mxu0 %v1183
    %1218 = vmatmul.bf16.gmra.mxu0 %v1195
    %v1219 = vpop.f32.mrf.mxu0
    %v1220 = vadd.f32 %v1161, %v1219
    %v1221 = vpop.f32.mrf.mxu0
    %1222 = vdwg.mxu0
    %v1223 = vsub.f32 0.0, %v1207
    %v1224 = vsub.f32 0.0, %v1220
    %v1225 = vmul.f32 %v1223, 1.442695
    %v1226 = vpow.pop %v1225
    %v1227 = vmul.f32 %v1224, 1.442695
    %v1228 = vpow.pop %v1227
    %v1229 = vadd.f32 %v1226, 1.0
    %v1230 = vadd.f32 %v1228, 1.0
    %v1231 = vrcp.pop %v1229
    %v1232 = vrcp.pop %v1230
    %v1233 = vpack.c.bf16 %v1231, %v1231
    %v1234 = vpack.c.bf16 %v1232, %v1232
    %v1235 = vld [vmem:[#allocation9] sm:$0xff]
    %v1236 = vld [vmem:[#allocation9 + $0x8] sm:$0xff]
    %v1237 = vld [vmem:[#allocation9 + $0x10] sm:$0xff]
    %v1238 = vld [vmem:[#allocation9 + $0x18] sm:$0xff]
    %v1239 = vld [vmem:[#allocation9 + $0x20] sm:$0xff]
    %v1240 = vld [vmem:[#allocation9 + $0x28] sm:$0xff]
    %v1241 = vld [vmem:[#allocation9 + $0x30] sm:$0xff]
    %v1242 = vld [vmem:[#allocation9 + $0x38] sm:$0xff]
    %v1243 = vld [vmem:[#allocation9 + $0x40] sm:$0xff]
    %v1244 = vld [vmem:[#allocation9 + $0x48] sm:$0xff]
    %v1245 = vld [vmem:[#allocation9 + $0x50] sm:$0xff]
    %v1246 = vld [vmem:[#allocation9 + $0x58] sm:$0xff]
    %v1247 = vld [vmem:[#allocation9 + $0x60] sm:$0xff]
    %v1248 = vld [vmem:[#allocation9 + $0x68] sm:$0xff]
    %v1249 = vld [vmem:[#allocation9 + $0x70] sm:$0xff]
    %v1250 = vld [vmem:[#allocation9 + $0x78] sm:$0xff]
    %v1251 = vld [vmem:[#allocation9 + $0x80] sm:$0xff]
    %v1252 = vld [vmem:[#allocation9 + $0x88] sm:$0xff]
    %v1253 = vld [vmem:[#allocation9 + $0x90] sm:$0xff]
    %v1254 = vld [vmem:[#allocation9 + $0x98] sm:$0xff]
    %v1255 = vld [vmem:[#allocation9 + $0xa0] sm:$0xff]
    %v1256 = vld [vmem:[#allocation9 + $0xa8] sm:$0xff]
    %v1257 = vld [vmem:[#allocation9 + $0xb0] sm:$0xff]
    %v1258 = vld [vmem:[#allocation9 + $0xb8] sm:$0xff]
    %v1259 = vld [vmem:[#allocation9 + $0xc0] sm:$0xff]
    %v1260 = vld [vmem:[#allocation9 + $0xc8] sm:$0xff]
    %v1261 = vld [vmem:[#allocation9 + $0xd0] sm:$0xff]
    %v1262 = vld [vmem:[#allocation9 + $0xd8] sm:$0xff]
    %v1263 = vld [vmem:[#allocation9 + $0xe0] sm:$0xff]
    %v1264 = vld [vmem:[#allocation9 + $0xe8] sm:$0xff]
    %v1265 = vld [vmem:[#allocation9 + $0xf0] sm:$0xff]
    %v1266 = vld [vmem:[#allocation9 + $0xf8] sm:$0xff]
    %v1267 = vld [vmem:[%s12] sm:$0x3]
    %v1269 = vperm.slane %v1267, 0
    %v1270 = vperm.slane %v1267, 1
    %v1305 = vunpack.c.l.b16 %v1235
    %v1306 = vunpack.c.h.b16 %v1235
    %v1307 = vunpack.c.l.b16 %v1236
    %v1308 = vunpack.c.h.b16 %v1236
    %v1309 = vunpack.c.l.b16 %v1237
    %v1310 = vunpack.c.h.b16 %v1237
    %v1311 = vunpack.c.l.b16 %v1238
    %v1312 = vunpack.c.h.b16 %v1238
    %v1313 = vunpack.c.l.b16 %v1239
    %v1314 = vunpack.c.h.b16 %v1239
    %v1315 = vunpack.c.l.b16 %v1240
    %v1316 = vunpack.c.h.b16 %v1240
    %v1317 = vunpack.c.l.b16 %v1241
    %v1318 = vunpack.c.h.b16 %v1241
    %v1319 = vunpack.c.l.b16 %v1242
    %v1320 = vunpack.c.h.b16 %v1242
    %v1321 = vunpack.c.l.b16 %v1243
    %v1322 = vunpack.c.h.b16 %v1243
    %v1323 = vunpack.c.l.b16 %v1244
    %v1324 = vunpack.c.h.b16 %v1244
    %v1325 = vunpack.c.l.b16 %v1245
    %v1326 = vunpack.c.h.b16 %v1245
    %v1327 = vunpack.c.l.b16 %v1246
    %v1328 = vunpack.c.h.b16 %v1246
    %v1329 = vunpack.c.l.b16 %v1247
    %v1330 = vunpack.c.h.b16 %v1247
    %v1331 = vunpack.c.l.b16 %v1248
    %v1332 = vunpack.c.h.b16 %v1248
    %v1333 = vunpack.c.l.b16 %v1249
    %v1334 = vunpack.c.h.b16 %v1249
    %v1335 = vunpack.c.l.b16 %v1250
    %v1336 = vunpack.c.h.b16 %v1250
    %v1337 = vunpack.c.l.b16 %v1251
    %v1338 = vunpack.c.h.b16 %v1251
    %v1339 = vunpack.c.l.b16 %v1252
    %v1340 = vunpack.c.h.b16 %v1252
    %v1341 = vunpack.c.l.b16 %v1253
    %v1342 = vunpack.c.h.b16 %v1253
    %v1343 = vunpack.c.l.b16 %v1254
    %v1344 = vunpack.c.h.b16 %v1254
    %v1345 = vunpack.c.l.b16 %v1255
    %v1346 = vunpack.c.h.b16 %v1255
    %v1347 = vunpack.c.l.b16 %v1256
    %v1348 = vunpack.c.h.b16 %v1256
    %v1349 = vunpack.c.l.b16 %v1257
    %v1350 = vunpack.c.h.b16 %v1257
    %v1351 = vunpack.c.l.b16 %v1258
    %v1352 = vunpack.c.h.b16 %v1258
    %v1353 = vunpack.c.l.b16 %v1259
    %v1354 = vunpack.c.h.b16 %v1259
    %v1355 = vunpack.c.l.b16 %v1260
    %v1356 = vunpack.c.h.b16 %v1260
    %v1357 = vunpack.c.l.b16 %v1261
    %v1358 = vunpack.c.h.b16 %v1261
    %v1359 = vunpack.c.l.b16 %v1262
    %v1360 = vunpack.c.h.b16 %v1262
    %v1361 = vunpack.c.l.b16 %v1263
    %v1362 = vunpack.c.h.b16 %v1263
    %v1363 = vunpack.c.l.b16 %v1264
    %v1364 = vunpack.c.h.b16 %v1264
    %v1365 = vunpack.c.l.b16 %v1265
    %v1366 = vunpack.c.h.b16 %v1265
    %v1367 = vunpack.c.l.b16 %v1266
    %v1368 = vunpack.c.h.b16 %v1266
    %v1369 = vpack.c.b16 %v1307, %v1305
    %v1370 = vpack.c.b16 %v1308, %v1306
    %v1371 = vpack.c.b16 %v1311, %v1309
    %v1372 = vpack.c.b16 %v1312, %v1310
    %v1373 = vpack.c.b16 %v1315, %v1313
    %v1374 = vpack.c.b16 %v1316, %v1314
    %v1375 = vpack.c.b16 %v1319, %v1317
    %v1376 = vpack.c.b16 %v1320, %v1318
    %v1377 = vpack.c.b16 %v1323, %v1321
    %v1378 = vpack.c.b16 %v1324, %v1322
    %v1379 = vpack.c.b16 %v1327, %v1325
    %v1380 = vpack.c.b16 %v1328, %v1326
    %v1381 = vpack.c.b16 %v1331, %v1329
    %v1382 = vpack.c.b16 %v1332, %v1330
    %v1383 = vpack.c.b16 %v1335, %v1333
    %v1384 = vpack.c.b16 %v1336, %v1334
    %v1385 = vpack.c.b16 %v1339, %v1337
    %v1386 = vpack.c.b16 %v1340, %v1338
    %v1387 = vpack.c.b16 %v1343, %v1341
    %v1388 = vpack.c.b16 %v1344, %v1342
    %v1389 = vpack.c.b16 %v1347, %v1345
    %v1390 = vpack.c.b16 %v1348, %v1346
    %v1391 = vpack.c.b16 %v1351, %v1349
    %v1392 = vpack.c.b16 %v1352, %v1350
    %v1393 = vpack.c.b16 %v1355, %v1353
    %v1394 = vpack.c.b16 %v1356, %v1354
    %v1395 = vpack.c.b16 %v1359, %v1357
    %v1396 = vpack.c.b16 %v1360, %v1358
    %v1397 = vpack.c.b16 %v1363, %v1361
    %v1398 = vpack.c.b16 %v1364, %v1362
    %v1399 = vpack.c.b16 %v1367, %v1365
    %v1400 = vpack.c.b16 %v1368, %v1366
    %1433 = vmatpush.bf16.msra.mxu0 %v1383
    %1434 = vmatpush.bf16.msra.mxu0 %v1381
    %1435 = vmatpush.bf16.msra.mxu0 %v1379
    %1436 = vmatpush.bf16.msra.mxu0 %v1377
    %1437 = vmatpush.bf16.msra.mxu0 %v1375
    %1438 = vmatpush.bf16.msra.mxu0 %v1373
    %1439 = vmatpush.bf16.msra.mxu0 %v1371
    %1440 = vmatpush.bf16.msra.mxu0 %v1369
    %1441 = vmatmul.bf16.gmra.mxu0 %v1233
    %v1442 = vpop.f32.mrf.mxu0
    %v1443 = vadd.f32 %v1269, %v1442
    %v1444 = vpop.f32.mrf.mxu0
    %1445 = vdwg.mxu0
    %1446 = vmatpush.bf16.msra.mxu0 %v1399
    %1447 = vmatpush.bf16.msra.mxu0 %v1397
    %1448 = vmatpush.bf16.msra.mxu0 %v1395
    %1449 = vmatpush.bf16.msra.mxu0 %v1393
    %1450 = vmatpush.bf16.msra.mxu0 %v1391
    %1451 = vmatpush.bf16.msra.mxu0 %v1389
    %1452 = vmatpush.bf16.msra.mxu0 %v1387
    %1453 = vmatpush.bf16.msra.mxu0 %v1385
    %1454 = vmatmul.bf16.gmra.mxu0 %v1234
    %v1455 = vpop.f32.mrf.mxu0
    %v1456 = vadd.f32 %v1443, %v1455
    %v1457 = vpop.f32.mrf.mxu0
    %1458 = vdwg.mxu0
    %1459 = vmatpush.bf16.msra.mxu0 %v1384
    %1460 = vmatpush.bf16.msra.mxu0 %v1382
    %1461 = vmatpush.bf16.msra.mxu0 %v1380
    %1462 = vmatpush.bf16.msra.mxu0 %v1378
    %1463 = vmatpush.bf16.msra.mxu0 %v1376
    %1464 = vmatpush.bf16.msra.mxu0 %v1374
    %1465 = vmatpush.bf16.msra.mxu0 %v1372
    %1466 = vmatpush.bf16.msra.mxu0 %v1370
    %1467 = vmatmul.bf16.gmra.mxu0 %v1233
    %v1468 = vpop.f32.mrf.mxu0
    %v1469 = vadd.f32 %v1270, %v1468
    %v1470 = vpop.f32.mrf.mxu0
    %1471 = vdwg.mxu0
    %1472 = vmatpush.bf16.msra.mxu0 %v1400
    %1473 = vmatpush.bf16.msra.mxu0 %v1398
    %1474 = vmatpush.bf16.msra.mxu0 %v1396
    %1475 = vmatpush.bf16.msra.mxu0 %v1394
    %1476 = vmatpush.bf16.msra.mxu0 %v1392
    %1477 = vmatpush.bf16.msra.mxu0 %v1390
    %1478 = vmatpush.bf16.msra.mxu0 %v1388
    %1479 = vmatpush.bf16.msra.mxu0 %v1386
    %1480 = vmatmul.bf16.gmra.mxu0 %v1234
    %v1481 = vpop.f32.mrf.mxu0
    %v1482 = vadd.f32 %v1469, %v1481
    %v1483 = vpop.f32.mrf.mxu0
    %1484 = vdwg.mxu0
    %v1485 = vsub.f32 0.0, %v1456
    %v1486 = vsub.f32 0.0, %v1482
    %v1487 = vmul.f32 %v1485, 1.442695
    %v1488 = vpow.pop %v1487
    %v1489 = vmul.f32 %v1486, 1.442695
    %v1490 = vpow.pop %v1489
    %v1491 = vadd.f32 %v1488, 1.0
    %v1492 = vadd.f32 %v1490, 1.0
    %v1493 = vrcp.pop %v1491
    %v1494 = vrcp.pop %v1492
    %v1495 = vpack.c.bf16 %v1493, %v1493
    %v1496 = vpack.c.bf16 %v1494, %v1494
    %v1497 = vld [vmem:[#allocation10] sm:$0xf]
    %v1498 = vld [vmem:[#allocation10 + $0x4] sm:$0xf]
    %v1499 = vld [vmem:[#allocation10 + $0x8] sm:$0xf]
    %v1500 = vld [vmem:[#allocation10 + $0xc] sm:$0xf]
    %v1501 = vld [vmem:[#allocation10 + $0x10] sm:$0xf]
    %v1502 = vld [vmem:[#allocation10 + $0x14] sm:$0xf]
    %v1503 = vld [vmem:[#allocation10 + $0x18] sm:$0xf]
    %v1504 = vld [vmem:[#allocation10 + $0x1c] sm:$0xf]
    %v1505 = vld [vmem:[#allocation10 + $0x20] sm:$0xf]
    %v1506 = vld [vmem:[#allocation10 + $0x24] sm:$0xf]
    %v1507 = vld [vmem:[#allocation10 + $0x28] sm:$0xf]
    %v1508 = vld [vmem:[#allocation10 + $0x2c] sm:$0xf]
    %v1509 = vld [vmem:[#allocation10 + $0x30] sm:$0xf]
    %v1510 = vld [vmem:[#allocation10 + $0x34] sm:$0xf]
    %v1511 = vld [vmem:[#allocation10 + $0x38] sm:$0xf]
    %v1512 = vld [vmem:[#allocation10 + $0x3c] sm:$0xf]
    %v1513 = vld [vmem:[#allocation10 + $0x40] sm:$0xf]
    %v1514 = vld [vmem:[#allocation10 + $0x44] sm:$0xf]
    %v1515 = vld [vmem:[#allocation10 + $0x48] sm:$0xf]
    %v1516 = vld [vmem:[#allocation10 + $0x4c] sm:$0xf]
    %v1517 = vld [vmem:[#allocation10 + $0x50] sm:$0xf]
    %v1518 = vld [vmem:[#allocation10 + $0x54] sm:$0xf]
    %v1519 = vld [vmem:[#allocation10 + $0x58] sm:$0xf]
    %v1520 = vld [vmem:[#allocation10 + $0x5c] sm:$0xf]
    %v1521 = vld [vmem:[#allocation10 + $0x60] sm:$0xf]
    %v1522 = vld [vmem:[#allocation10 + $0x64] sm:$0xf]
    %v1523 = vld [vmem:[#allocation10 + $0x68] sm:$0xf]
    %v1524 = vld [vmem:[#allocation10 + $0x6c] sm:$0xf]
    %v1525 = vld [vmem:[#allocation10 + $0x70] sm:$0xf]
    %v1526 = vld [vmem:[#allocation10 + $0x74] sm:$0xf]
    %v1527 = vld [vmem:[#allocation10 + $0x78] sm:$0xf]
    %v1528 = vld [vmem:[#allocation10 + $0x7c] sm:$0xf]
    %v1529 = vld [vmem:[%s14] sm:$0x1]
    %v1531 = vperm.slane %v1529, 0
    %v1565 = vunpack.c.l.b16 %v1497
    %v1566 = vunpack.c.l.b16 %v1498
    %v1567 = vunpack.c.l.b16 %v1499
    %v1568 = vunpack.c.l.b16 %v1500
    %v1569 = vunpack.c.l.b16 %v1501
    %v1570 = vunpack.c.l.b16 %v1502
    %v1571 = vunpack.c.l.b16 %v1503
    %v1572 = vunpack.c.l.b16 %v1504
    %v1573 = vunpack.c.l.b16 %v1505
    %v1574 = vunpack.c.l.b16 %v1506
    %v1575 = vunpack.c.l.b16 %v1507
    %v1576 = vunpack.c.l.b16 %v1508
    %v1577 = vunpack.c.l.b16 %v1509
    %v1578 = vunpack.c.l.b16 %v1510
    %v1579 = vunpack.c.l.b16 %v1511
    %v1580 = vunpack.c.l.b16 %v1512
    %v1581 = vunpack.c.l.b16 %v1513
    %v1582 = vunpack.c.l.b16 %v1514
    %v1583 = vunpack.c.l.b16 %v1515
    %v1584 = vunpack.c.l.b16 %v1516
    %v1585 = vunpack.c.l.b16 %v1517
    %v1586 = vunpack.c.l.b16 %v1518
    %v1587 = vunpack.c.l.b16 %v1519
    %v1588 = vunpack.c.l.b16 %v1520
    %v1589 = vunpack.c.l.b16 %v1521
    %v1590 = vunpack.c.l.b16 %v1522
    %v1591 = vunpack.c.l.b16 %v1523
    %v1592 = vunpack.c.l.b16 %v1524
    %v1593 = vunpack.c.l.b16 %v1525
    %v1594 = vunpack.c.l.b16 %v1526
    %v1595 = vunpack.c.l.b16 %v1527
    %v1596 = vunpack.c.l.b16 %v1528
    %v1597 = vpack.c.b16 %v1566, %v1565
    %v1598 = vpack.c.b16 %v1568, %v1567
    %v1599 = vpack.c.b16 %v1570, %v1569
    %v1600 = vpack.c.b16 %v1572, %v1571
    %v1601 = vpack.c.b16 %v1574, %v1573
    %v1602 = vpack.c.b16 %v1576, %v1575
    %v1603 = vpack.c.b16 %v1578, %v1577
    %v1604 = vpack.c.b16 %v1580, %v1579
    %v1605 = vpack.c.b16 %v1582, %v1581
    %v1606 = vpack.c.b16 %v1584, %v1583
    %v1607 = vpack.c.b16 %v1586, %v1585
    %v1608 = vpack.c.b16 %v1588, %v1587
    %v1609 = vpack.c.b16 %v1590, %v1589
    %v1610 = vpack.c.b16 %v1592, %v1591
    %v1611 = vpack.c.b16 %v1594, %v1593
    %v1612 = vpack.c.b16 %v1596, %v1595
    %1629 = vmatpush.bf16.msra.mxu0 %v1604
    %1630 = vmatpush.bf16.msra.mxu0 %v1603
    %1631 = vmatpush.bf16.msra.mxu0 %v1602
    %1632 = vmatpush.bf16.msra.mxu0 %v1601
    %1633 = vmatpush.bf16.msra.mxu0 %v1600
    %1634 = vmatpush.bf16.msra.mxu0 %v1599
    %1635 = vmatpush.bf16.msra.mxu0 %v1598
    %1636 = vmatpush.bf16.msra.mxu0 %v1597
    %1637 = vmatmul.bf16.gmra.mxu0 %v1495
    %v1638 = vpop.f32.mrf.mxu0
    %v1639 = vadd.f32 %v1531, %v1638
    %v1640 = vpop.f32.mrf.mxu0
    %1641 = vdwg.mxu0
    %1642 = vmatpush.bf16.msra.mxu0 %v1612
    %1643 = vmatpush.bf16.msra.mxu0 %v1611
    %1644 = vmatpush.bf16.msra.mxu0 %v1610
    %1645 = vmatpush.bf16.msra.mxu0 %v1609
    %1646 = vmatpush.bf16.msra.mxu0 %v1608
    %1647 = vmatpush.bf16.msra.mxu0 %v1607
    %1648 = vmatpush.bf16.msra.mxu0 %v1606
    %1649 = vmatpush.bf16.msra.mxu0 %v1605
    %1650 = vmatmul.bf16.gmra.mxu0 %v1496
    %v1651 = vpop.f32.mrf.mxu0
    %v1652 = vadd.f32 %v1639, %v1651
    %v1653 = vpop.f32.mrf.mxu0
    %1654 = vdwg.mxu0
    %v1655 = vpack.c.bf16 %v1652, %v1652
    %1656 = vst [vmem:[%s17] sm:$0xf] %v1655
    // Predicated region
    $region86: #{_triplet_forward.1} parent=1 // pred_check
      _
    $region87: #{_triplet_forward.1} parent=1 // pred_check_branch
      %1658 = sbr.rel (0) target = $region89
    $region88: #{_triplet_forward.1} parent=1 // pred_region
      _
    $region89: #{_triplet_forward.1} parent=1 // pred_fallthru
      _
    // Predicated region
    $region90: #{_triplet_forward.1} parent=1 // pred_check
      _
    $region91: #{_triplet_forward.1} parent=1 // pred_check_branch
      %1660 = sbr.rel (0) target = $region93
    $region92: #{_triplet_forward.1} parent=1 // pred_region
      _
    $region93: #{_triplet_forward.1} parent=1 // pred_fallthru
      _
    // Predicated region
    $region94: #{_triplet_forward.1} parent=1 // pred_check
      _
    $region95: #{_triplet_forward.1} parent=1 // pred_check_branch
      %1662 = sbr.rel (0) target = $region97
    $region96: #{_triplet_forward.1} parent=1 // pred_region
      _
    $region97: #{_triplet_forward.1} parent=1 // pred_fallthru
      _
    // Predicated region
    $region98: #{_triplet_forward.1} parent=1 // pred_check
      _
    $region99: #{_triplet_forward.1} parent=1 // pred_check_branch
      %1664 = sbr.rel (0) target = $region101
    $region100: #{_triplet_forward.1} parent=1 // pred_region
      _
    $region101: #{_triplet_forward.1} parent=1 // pred_fallthru
      _
    // Predicated region
    $region102: #{_triplet_forward.1} parent=1 // pred_check
      _
    $region103: #{_triplet_forward.1} parent=1 // pred_check_branch
      %1666 = sbr.rel (0) target = $region105
    $region104: #{_triplet_forward.1} parent=1 // pred_region
      _
    $region105: #{_triplet_forward.1} parent=1 // pred_fallthru
      _
    // Predicated region
    $region106: #{_triplet_forward.1} parent=1 // pred_check
      _
    $region107: #{_triplet_forward.1} parent=1 // pred_check_branch
      %1668 = sbr.rel (0) target = $region109
    $region108: #{_triplet_forward.1} parent=1 // pred_region
      _
    $region109: #{_triplet_forward.1} parent=1 // pred_fallthru
      _
    %1669 = vsyncpa [#allocation3], 1
    %1670 = vsyncpa [#allocation5], 1
    %1671 = vsyncpa [#allocation8], 1
    %1672 = vsyncpa [#allocation11], 1

</llo_original>
